<compile_context>
chip_gen: v6e
topology: v6e:2x2x1
jax: 0.10.0
libtpu: 0.0.40
codegen_flags: <defaults>
</compile_context>

<pallas_src>
import jax
import jax.numpy as jnp
from jax.experimental import pallas as pl
from jax.experimental.pallas import tpu as pltpu


def _relu_kernel(x_ref, o_ref):
    # Pure VPU elementwise max(x, 0) on the current VMEM tile.
    o_ref[...] = jnp.maximum(x_ref[...], jnp.zeros((), x_ref.dtype))


def pallas_relu(x: jax.Array) -> jax.Array:
    """ReLU over an arbitrary-shaped tensor using a Pallas TPU kernel."""
    orig_shape = x.shape
    dtype = x.dtype
    total = x.size
    if total == 0:
        return x

    itemsize = jnp.dtype(dtype).itemsize
    # Sub-32-bit dtypes pack along sublanes: 8 (f32) / 16 (bf16) / 32 (int8).
    pack = max(1, 4 // itemsize)
    sublane_mult = 8 * pack
    cols = 512  # lane-dense: large multiple of 128 -> unmasked vector stores

    # Flatten and pad so the 2D view is (rows, cols) with rows a multiple of
    # the packed sublane count (padding is zeros; ReLU(0) == 0, sliced off).
    flat = x.reshape(-1)
    chunk = cols * sublane_mult
    padded_total = ((total + chunk - 1) // chunk) * chunk
    pad = padded_total - total
    if pad:
        flat = jnp.pad(flat, (0, pad))
    rows = padded_total // cols
    x2d = flat.reshape(rows, cols)

    # ~2 MiB blocks: big enough to amortize the ~0.35 us/step grid overhead
    # (>=85% of HBM roofline), small enough that double-buffered in+out
    # (4 live buffers ~ 8 MiB) fits every generation's default scoped VMEM,
    # including v7x's 64 MiB physical VMEM.
    target_block_bytes = 2 * 1024 * 1024
    row_tile = (target_block_bytes // (cols * itemsize)) // sublane_mult * sublane_mult
    row_tile = max(sublane_mult, min(row_tile, rows))
    grid = (pl.cdiv(rows, row_tile),)  # ragged final block is masked by Pallas

    out2d = pl.pallas_call(
        _relu_kernel,
        out_shape=jax.ShapeDtypeStruct((rows, cols), dtype),
        grid_spec=pltpu.PrefetchScalarGridSpec(
            num_scalar_prefetch=0,
            grid=grid,
            in_specs=[pl.BlockSpec((row_tile, cols), lambda i: (i, 0))],
            out_specs=pl.BlockSpec((row_tile, cols), lambda i: (i, 0)),
        ),
        compiler_params=pltpu.CompilerParams(
            dimension_semantics=("parallel",),  # shards across TCs on v7x
        ),
        input_output_aliases={0: 0},  # in-place semantics, donate input HBM
    )(x2d)

    out_flat = out2d.reshape(-1)
    if pad:
        out_flat = out_flat[:total]
    return out_flat.reshape(orig_shape)


if __name__ == "__main__":
    key = jax.random.PRNGKey(0)

    # Shape from the module spec: NCHW input to ReLU(inplace=True).
    x = jax.random.normal(key, (1, 2112, 14, 14), dtype=jnp.float32)
    y = pallas_relu(x)
    jax.block_until_ready(y)
    ref = jnp.maximum(x, 0.0)
    assert y.shape == x.shape and y.dtype == x.dtype
    assert jnp.array_equal(y, ref)

    # Odd shape exercising the padding / non-divisible path.
    x_odd = jax.random.normal(jax.random.PRNGKey(0), (2, 3, 7, 5), dtype=jnp.float32)
    y_odd = pallas_relu(x_odd)
    jax.block_until_ready(y_odd)
    assert jnp.array_equal(y_odd, jnp.maximum(x_odd, 0.0))

    print("KERNEL_OK")
</pallas_src>

<mosaic_0001>
module attributes {stable_mosaic.version = 11 : i64} {
  func.func @_relu_kernel(%arg0: i32, %arg1: memref<816x512xf32, #tpu.memory_space<vmem>>, %arg2: memref<816x512xf32, #tpu.memory_space<vmem>>) attributes {dimension_semantics = [#tpu.dimension_semantics<parallel>], iteration_bounds = array<i64: 1>, scalar_prefetch = 0 : i64, scratch_operands = 0 : i64, tpu.core_type = #tpu.core_type<tc>, window_params = [{transform_indices = @transform_0, window_bounds = array<i64: 816, 512>}, {transform_indices = @transform_1, window_bounds = array<i64: 816, 512>}]} {
    %c0 = arith.constant 0 : index
    %c0_0 = arith.constant 0 : index
    %0 = vector.load %arg1[%c0, %c0_0] : memref<816x512xf32, #tpu.memory_space<vmem>>, vector<816x512xf32>
    %cst = arith.constant 0.000000e+00 : f32
    %1 = vector.broadcast %cst : f32 to vector<816x512xf32>
    %2 = arith.maximumf %0, %1 : vector<816x512xf32>
    %c0_1 = arith.constant 0 : index
    %c0_2 = arith.constant 0 : index
    %3 = vector.load %arg2[%c0_1, %c0_2] : memref<816x512xf32, #tpu.memory_space<vmem>>, vector<816x512xf32>
    tpu.vector_store %arg2[%c0_1, %c0_2], %2 {strides = array<i32>} : memref<816x512xf32, #tpu.memory_space<vmem>>, vector<816x512xf32>,
    return
  }
  func.func @transform_0(%arg0: i32) -> (i32, i32) {
    %c0_i32 = arith.constant 0 : i32
    %c0_i32_0 = arith.constant 0 : i32
    return %arg0, %c0_i32 : i32, i32
  }
  func.func @transform_1(%arg0: i32) -> (i32, i32) {
    %c0_i32 = arith.constant 0 : i32
    %c0_i32_0 = arith.constant 0 : i32
    return %arg0, %c0_i32 : i32, i32
  }
}

</mosaic_0001>

<llo_original>
// kernel: tpu_custom_call.1
$region0: #{tpu_custom_call.1}
  #allocation0 [shape = 'u32[]', space=smem, size = 0x4, offset = 0x4, fixed_abs, tag = 'smem constant byte address 0x4 - core index']
  #allocation1 [shape = 'u32[144,128]{1,0:T(1,128)}', space=vmem, size = 0x12000, scoped, tag = 'internal scratch']
  %s0 = inlined_call_operand.hbm [shape: f32[816,512], index: 0, kind: input, shape index: {}, may-alias: {0,1}]
  %s1 = inlined_call_operand.hbm [shape: f32[816,512], index: 1, kind: output, shape index: {}, may-alias: {0,1}]
  %s2 = sld [smem:[#allocation0]]
  $region18: #{tpu_custom_call.1} parent=0
    _
  %s4 = ssub.s32 1, %s2
  %s5 = scalar_select 0, %s4, %s2
  $region1: #{tpu_custom_call.1} parent=0
    #allocation2 [shape = 'u8[1671168]{0}', space=vmem, size = 0x198000, scoped, tag = 'input window, operand 0, single buffered']
    #allocation3 [shape = 's32[1]{0}', space=sflag, size = 0x4, scoped, tag = 'scoped memory for tpu_custom_call.1']
    #allocation4 [shape = 's32[1]{0}', space=sflag, size = 0x4, scoped, tag = 'scoped memory for tpu_custom_call.1']
    #allocation5 [shape = 'u8[1671168]{0}', space=vmem, size = 0x198000, scoped, tag = 'output window, operand 0, single buffered']
    %6 = vsyncpa [#allocation3], 0
    %7 = vsyncpa [#allocation4], 0
    // Predicated region
    $region2: #{tpu_custom_call.1} parent=1 // pred_check
      _
    $region3: #{tpu_custom_call.1} parent=1 // pred_check_branch
      %9 = sbr.rel (0) target = $region5
    $region4: #{tpu_custom_call.1} parent=1 // pred_region
      %s11 = ssub.s32 52224, 52224
      %12 = vsyncadd [#allocation3], %s11
      %s13 = sshll.u32 [#allocation2], 4
      %s14 = int_to_ptr.vmem [resolvable:$true] %s13
      %19 = dma.hbm_to_vmem [thread:$0]  %s0, 52224, %s14, [#allocation3], 512, 512, 32
    $region5: #{tpu_custom_call.1} parent=1 // pred_fallthru
      _
    // Predicated region
    $region6: #{tpu_custom_call.1} parent=1 // pred_check
      _
    $region7: #{tpu_custom_call.1} parent=1 // pred_check_branch
      %21 = sbr.rel (0) target = $region9
    $region8: #{tpu_custom_call.1} parent=1 // pred_region
      %22 = dma.done [#allocation3], 52224
    $region9: #{tpu_custom_call.1} parent=1 // pred_fallthru
      _
    %v23 = vld [vmem:[#allocation2] sm:$0xff]
    %v24 = vld [vmem:[#allocation2 + $0x8] sm:$0xff]
    %v25 = vld [vmem:[#allocation2 + $0x10] sm:$0xff]
    %v26 = vld [vmem:[#allocation2 + $0x18] sm:$0xff]
    %v27 = vld [vmem:[#allocation2 + $0x20] sm:$0xff]
    %v28 = vld [vmem:[#allocation2 + $0x28] sm:$0xff]
    %v29 = vld [vmem:[#allocation2 + $0x30] sm:$0xff]
    %v30 = vld [vmem:[#allocation2 + $0x38] sm:$0xff]
    %v31 = vld [vmem:[#allocation2 + $0x40] sm:$0xff]
    %v32 = vld [vmem:[#allocation2 + $0x48] sm:$0xff]
    %v33 = vld [vmem:[#allocation2 + $0x50] sm:$0xff]
    %v34 = vld [vmem:[#allocation2 + $0x58] sm:$0xff]
    %v35 = vld [vmem:[#allocation2 + $0x60] sm:$0xff]
    %v36 = vld [vmem:[#allocation2 + $0x68] sm:$0xff]
    %v37 = vld [vmem:[#allocation2 + $0x70] sm:$0xff]
    %v38 = vld [vmem:[#allocation2 + $0x78] sm:$0xff]
    %v39 = vld [vmem:[#allocation2 + $0x80] sm:$0xff]
    %v40 = vld [vmem:[#allocation2 + $0x88] sm:$0xff]
    %v41 = vld [vmem:[#allocation2 + $0x90] sm:$0xff]
    %v42 = vld [vmem:[#allocation2 + $0x98] sm:$0xff]
    %v43 = vld [vmem:[#allocation2 + $0xa0] sm:$0xff]
    %v44 = vld [vmem:[#allocation2 + $0xa8] sm:$0xff]
    %v45 = vld [vmem:[#allocation2 + $0xb0] sm:$0xff]
    %v46 = vld [vmem:[#allocation2 + $0xb8] sm:$0xff]
    %v47 = vld [vmem:[#allocation2 + $0xc0] sm:$0xff]
    %v48 = vld [vmem:[#allocation2 + $0xc8] sm:$0xff]
    %v49 = vld [vmem:[#allocation2 + $0xd0] sm:$0xff]
    %v50 = vld [vmem:[#allocation2 + $0xd8] sm:$0xff]
    %v51 = vld [vmem:[#allocation2 + $0xe0] sm:$0xff]
    %v52 = vld [vmem:[#allocation2 + $0xe8] sm:$0xff]
    %v53 = vld [vmem:[#allocation2 + $0xf0] sm:$0xff]
    %v54 = vld [vmem:[#allocation2 + $0xf8] sm:$0xff]
    %v55 = vld [vmem:[#allocation2 + $0x100] sm:$0xff]
    %v56 = vld [vmem:[#allocation2 + $0x108] sm:$0xff]
    %v57 = vld [vmem:[#allocation2 + $0x110] sm:$0xff]
    %v58 = vld [vmem:[#allocation2 + $0x118] sm:$0xff]
    %v59 = vld [vmem:[#allocation2 + $0x120] sm:$0xff]
    %v60 = vld [vmem:[#allocation2 + $0x128] sm:$0xff]
    %v61 = vld [vmem:[#allocation2 + $0x130] sm:$0xff]
    %v62 = vld [vmem:[#allocation2 + $0x138] sm:$0xff]
    %v63 = vld [vmem:[#allocation2 + $0x140] sm:$0xff]
    %v64 = vld [vmem:[#allocation2 + $0x148] sm:$0xff]
    %v65 = vld [vmem:[#allocation2 + $0x150] sm:$0xff]
    %v66 = vld [vmem:[#allocation2 + $0x158] sm:$0xff]
    %v67 = vld [vmem:[#allocation2 + $0x160] sm:$0xff]
    %v68 = vld [vmem:[#allocation2 + $0x168] sm:$0xff]
    %v69 = vld [vmem:[#allocation2 + $0x170] sm:$0xff]
    %v70 = vld [vmem:[#allocation2 + $0x178] sm:$0xff]
    %v71 = vld [vmem:[#allocation2 + $0x180] sm:$0xff]
    %v72 = vld [vmem:[#allocation2 + $0x188] sm:$0xff]
    %v73 = vld [vmem:[#allocation2 + $0x190] sm:$0xff]
    %v74 = vld [vmem:[#allocation2 + $0x198] sm:$0xff]
    %v75 = vld [vmem:[#allocation2 + $0x1a0] sm:$0xff]
    %v76 = vld [vmem:[#allocation2 + $0x1a8] sm:$0xff]
    %v77 = vld [vmem:[#allocation2 + $0x1b0] sm:$0xff]
    %v78 = vld [vmem:[#allocation2 + $0x1b8] sm:$0xff]
    %v79 = vld [vmem:[#allocation2 + $0x1c0] sm:$0xff]
    %v80 = vld [vmem:[#allocation2 + $0x1c8] sm:$0xff]
    %v81 = vld [vmem:[#allocation2 + $0x1d0] sm:$0xff]
    %v82 = vld [vmem:[#allocation2 + $0x1d8] sm:$0xff]
    %v83 = vld [vmem:[#allocation2 + $0x1e0] sm:$0xff]
    %v84 = vld [vmem:[#allocation2 + $0x1e8] sm:$0xff]
    %v85 = vld [vmem:[#allocation2 + $0x1f0] sm:$0xff]
    %v86 = vld [vmem:[#allocation2 + $0x1f8] sm:$0xff]
    %v87 = vld [vmem:[#allocation2 + $0x200] sm:$0xff]
    %v88 = vld [vmem:[#allocation2 + $0x208] sm:$0xff]
    %v89 = vld [vmem:[#allocation2 + $0x210] sm:$0xff]
    %v90 = vld [vmem:[#allocation2 + $0x218] sm:$0xff]
    %v91 = vld [vmem:[#allocation2 + $0x220] sm:$0xff]
    %v92 = vld [vmem:[#allocation2 + $0x228] sm:$0xff]
    %v93 = vld [vmem:[#allocation2 + $0x230] sm:$0xff]
    %v94 = vld [vmem:[#allocation2 + $0x238] sm:$0xff]
    %v95 = vld [vmem:[#allocation2 + $0x240] sm:$0xff]
    %v96 = vld [vmem:[#allocation2 + $0x248] sm:$0xff]
    %v97 = vld [vmem:[#allocation2 + $0x250] sm:$0xff]
    %v98 = vld [vmem:[#allocation2 + $0x258] sm:$0xff]
    %v99 = vld [vmem:[#allocation2 + $0x260] sm:$0xff]
    %v100 = vld [vmem:[#allocation2 + $0x268] sm:$0xff]
    %v101 = vld [vmem:[#allocation2 + $0x270] sm:$0xff]
    %v102 = vld [vmem:[#allocation2 + $0x278] sm:$0xff]
    %v103 = vld [vmem:[#allocation2 + $0x280] sm:$0xff]
    %v104 = vld [vmem:[#allocation2 + $0x288] sm:$0xff]
    %v105 = vld [vmem:[#allocation2 + $0x290] sm:$0xff]
    %v106 = vld [vmem:[#allocation2 + $0x298] sm:$0xff]
    %v107 = vld [vmem:[#allocation2 + $0x2a0] sm:$0xff]
    %v108 = vld [vmem:[#allocation2 + $0x2a8] sm:$0xff]
    %v109 = vld [vmem:[#allocation2 + $0x2b0] sm:$0xff]
    %v110 = vld [vmem:[#allocation2 + $0x2b8] sm:$0xff]
    %v111 = vld [vmem:[#allocation2 + $0x2c0] sm:$0xff]
    %v112 = vld [vmem:[#allocation2 + $0x2c8] sm:$0xff]
    %v113 = vld [vmem:[#allocation2 + $0x2d0] sm:$0xff]
    %v114 = vld [vmem:[#allocation2 + $0x2d8] sm:$0xff]
    %v115 = vld [vmem:[#allocation2 + $0x2e0] sm:$0xff]
    %v116 = vld [vmem:[#allocation2 + $0x2e8] sm:$0xff]
    %v117 = vld [vmem:[#allocation2 + $0x2f0] sm:$0xff]
    %v118 = vld [vmem:[#allocation2 + $0x2f8] sm:$0xff]
    %v119 = vld [vmem:[#allocation2 + $0x300] sm:$0xff]
    %v120 = vld [vmem:[#allocation2 + $0x308] sm:$0xff]
    %v121 = vld [vmem:[#allocation2 + $0x310] sm:$0xff]
    %v122 = vld [vmem:[#allocation2 + $0x318] sm:$0xff]
    %v123 = vld [vmem:[#allocation2 + $0x320] sm:$0xff]
    %v124 = vld [vmem:[#allocation2 + $0x328] sm:$0xff]
    %v125 = vld [vmem:[#allocation2 + $0x330] sm:$0xff]
    %v126 = vld [vmem:[#allocation2 + $0x338] sm:$0xff]
    %v127 = vld [vmem:[#allocation2 + $0x340] sm:$0xff]
    %v128 = vld [vmem:[#allocation2 + $0x348] sm:$0xff]
    %v129 = vld [vmem:[#allocation2 + $0x350] sm:$0xff]
    %v130 = vld [vmem:[#allocation2 + $0x358] sm:$0xff]
    %v131 = vld [vmem:[#allocation2 + $0x360] sm:$0xff]
    %v132 = vld [vmem:[#allocation2 + $0x368] sm:$0xff]
    %v133 = vld [vmem:[#allocation2 + $0x370] sm:$0xff]
    %v134 = vld [vmem:[#allocation2 + $0x378] sm:$0xff]
    %v135 = vld [vmem:[#allocation2 + $0x380] sm:$0xff]
    %v136 = vld [vmem:[#allocation2 + $0x388] sm:$0xff]
    %v137 = vld [vmem:[#allocation2 + $0x390] sm:$0xff]
    %v138 = vld [vmem:[#allocation2 + $0x398] sm:$0xff]
    %v139 = vld [vmem:[#allocation2 + $0x3a0] sm:$0xff]
    %v140 = vld [vmem:[#allocation2 + $0x3a8] sm:$0xff]
    %v141 = vld [vmem:[#allocation2 + $0x3b0] sm:$0xff]
    %v142 = vld [vmem:[#allocation2 + $0x3b8] sm:$0xff]
    %v143 = vld [vmem:[#allocation2 + $0x3c0] sm:$0xff]
    %v144 = vld [vmem:[#allocation2 + $0x3c8] sm:$0xff]
    %v145 = vld [vmem:[#allocation2 + $0x3d0] sm:$0xff]
    %v146 = vld [vmem:[#allocation2 + $0x3d8] sm:$0xff]
    %v147 = vld [vmem:[#allocation2 + $0x3e0] sm:$0xff]
    %v148 = vld [vmem:[#allocation2 + $0x3e8] sm:$0xff]
    %v149 = vld [vmem:[#allocation2 + $0x3f0] sm:$0xff]
    %v150 = vld [vmem:[#allocation2 + $0x3f8] sm:$0xff]
    %v151 = vld [vmem:[#allocation2 + $0x400] sm:$0xff]
    %v152 = vld [vmem:[#allocation2 + $0x408] sm:$0xff]
    %v153 = vld [vmem:[#allocation2 + $0x410] sm:$0xff]
    %v154 = vld [vmem:[#allocation2 + $0x418] sm:$0xff]
    %v155 = vld [vmem:[#allocation2 + $0x420] sm:$0xff]
    %v156 = vld [vmem:[#allocation2 + $0x428] sm:$0xff]
    %v157 = vld [vmem:[#allocation2 + $0x430] sm:$0xff]
    %v158 = vld [vmem:[#allocation2 + $0x438] sm:$0xff]
    %v159 = vld [vmem:[#allocation2 + $0x440] sm:$0xff]
    %v160 = vld [vmem:[#allocation2 + $0x448] sm:$0xff]
    %v161 = vld [vmem:[#allocation2 + $0x450] sm:$0xff]
    %v162 = vld [vmem:[#allocation2 + $0x458] sm:$0xff]
    %v163 = vld [vmem:[#allocation2 + $0x460] sm:$0xff]
    %v164 = vld [vmem:[#allocation2 + $0x468] sm:$0xff]
    %v165 = vld [vmem:[#allocation2 + $0x470] sm:$0xff]
    %v166 = vld [vmem:[#allocation2 + $0x478] sm:$0xff]
    %v167 = vld [vmem:[#allocation2 + $0x480] sm:$0xff]
    %v168 = vld [vmem:[#allocation2 + $0x488] sm:$0xff]
    %v169 = vld [vmem:[#allocation2 + $0x490] sm:$0xff]
    %v170 = vld [vmem:[#allocation2 + $0x498] sm:$0xff]
    %v171 = vld [vmem:[#allocation2 + $0x4a0] sm:$0xff]
    %v172 = vld [vmem:[#allocation2 + $0x4a8] sm:$0xff]
    %v173 = vld [vmem:[#allocation2 + $0x4b0] sm:$0xff]
    %v174 = vld [vmem:[#allocation2 + $0x4b8] sm:$0xff]
    %v175 = vld [vmem:[#allocation2 + $0x4c0] sm:$0xff]
    %v176 = vld [vmem:[#allocation2 + $0x4c8] sm:$0xff]
    %v177 = vld [vmem:[#allocation2 + $0x4d0] sm:$0xff]
    %v178 = vld [vmem:[#allocation2 + $0x4d8] sm:$0xff]
    %v179 = vld [vmem:[#allocation2 + $0x4e0] sm:$0xff]
    %v180 = vld [vmem:[#allocation2 + $0x4e8] sm:$0xff]
    %v181 = vld [vmem:[#allocation2 + $0x4f0] sm:$0xff]
    %v182 = vld [vmem:[#allocation2 + $0x4f8] sm:$0xff]
    %v183 = vld [vmem:[#allocation2 + $0x500] sm:$0xff]
    %v184 = vld [vmem:[#allocation2 + $0x508] sm:$0xff]
    %v185 = vld [vmem:[#allocation2 + $0x510] sm:$0xff]
    %v186 = vld [vmem:[#allocation2 + $0x518] sm:$0xff]
    %v187 = vld [vmem:[#allocation2 + $0x520] sm:$0xff]
    %v188 = vld [vmem:[#allocation2 + $0x528] sm:$0xff]
    %v189 = vld [vmem:[#allocation2 + $0x530] sm:$0xff]
    %v190 = vld [vmem:[#allocation2 + $0x538] sm:$0xff]
    %v191 = vld [vmem:[#allocation2 + $0x540] sm:$0xff]
    %v192 = vld [vmem:[#allocation2 + $0x548] sm:$0xff]
    %v193 = vld [vmem:[#allocation2 + $0x550] sm:$0xff]
    %v194 = vld [vmem:[#allocation2 + $0x558] sm:$0xff]
    %v195 = vld [vmem:[#allocation2 + $0x560] sm:$0xff]
    %v196 = vld [vmem:[#allocation2 + $0x568] sm:$0xff]
    %v197 = vld [vmem:[#allocation2 + $0x570] sm:$0xff]
    %v198 = vld [vmem:[#allocation2 + $0x578] sm:$0xff]
    %v199 = vld [vmem:[#allocation2 + $0x580] sm:$0xff]
    %v200 = vld [vmem:[#allocation2 + $0x588] sm:$0xff]
    %v201 = vld [vmem:[#allocation2 + $0x590] sm:$0xff]
    %v202 = vld [vmem:[#allocation2 + $0x598] sm:$0xff]
    %v203 = vld [vmem:[#allocation2 + $0x5a0] sm:$0xff]
    %v204 = vld [vmem:[#allocation2 + $0x5a8] sm:$0xff]
    %v205 = vld [vmem:[#allocation2 + $0x5b0] sm:$0xff]
    %v206 = vld [vmem:[#allocation2 + $0x5b8] sm:$0xff]
    %v207 = vld [vmem:[#allocation2 + $0x5c0] sm:$0xff]
    %v208 = vld [vmem:[#allocation2 + $0x5c8] sm:$0xff]
    %v209 = vld [vmem:[#allocation2 + $0x5d0] sm:$0xff]
    %v210 = vld [vmem:[#allocation2 + $0x5d8] sm:$0xff]
    %v211 = vld [vmem:[#allocation2 + $0x5e0] sm:$0xff]
    %v212 = vld [vmem:[#allocation2 + $0x5e8] sm:$0xff]
    %v213 = vld [vmem:[#allocation2 + $0x5f0] sm:$0xff]
    %v214 = vld [vmem:[#allocation2 + $0x5f8] sm:$0xff]
    %v215 = vld [vmem:[#allocation2 + $0x600] sm:$0xff]
    %v216 = vld [vmem:[#allocation2 + $0x608] sm:$0xff]
    %v217 = vld [vmem:[#allocation2 + $0x610] sm:$0xff]
    %v218 = vld [vmem:[#allocation2 + $0x618] sm:$0xff]
    %v219 = vld [vmem:[#allocation2 + $0x620] sm:$0xff]
    %v220 = vld [vmem:[#allocation2 + $0x628] sm:$0xff]
    %v221 = vld [vmem:[#allocation2 + $0x630] sm:$0xff]
    %v222 = vld [vmem:[#allocation2 + $0x638] sm:$0xff]
    %v223 = vld [vmem:[#allocation2 + $0x640] sm:$0xff]
    %v224 = vld [vmem:[#allocation2 + $0x648] sm:$0xff]
    %v225 = vld [vmem:[#allocation2 + $0x650] sm:$0xff]
    %v226 = vld [vmem:[#allocation2 + $0x658] sm:$0xff]
    %v227 = vld [vmem:[#allocation2 + $0x660] sm:$0xff]
    %v228 = vld [vmem:[#allocation2 + $0x668] sm:$0xff]
    %v229 = vld [vmem:[#allocation2 + $0x670] sm:$0xff]
    %v230 = vld [vmem:[#allocation2 + $0x678] sm:$0xff]
    %v231 = vld [vmem:[#allocation2 + $0x680] sm:$0xff]
    %v232 = vld [vmem:[#allocation2 + $0x688] sm:$0xff]
    %v233 = vld [vmem:[#allocation2 + $0x690] sm:$0xff]
    %v234 = vld [vmem:[#allocation2 + $0x698] sm:$0xff]
    %v235 = vld [vmem:[#allocation2 + $0x6a0] sm:$0xff]
    %v236 = vld [vmem:[#allocation2 + $0x6a8] sm:$0xff]
    %v237 = vld [vmem:[#allocation2 + $0x6b0] sm:$0xff]
    %v238 = vld [vmem:[#allocation2 + $0x6b8] sm:$0xff]
    %v239 = vld [vmem:[#allocation2 + $0x6c0] sm:$0xff]
    %v240 = vld [vmem:[#allocation2 + $0x6c8] sm:$0xff]
    %v241 = vld [vmem:[#allocation2 + $0x6d0] sm:$0xff]
    %v242 = vld [vmem:[#allocation2 + $0x6d8] sm:$0xff]
    %v243 = vld [vmem:[#allocation2 + $0x6e0] sm:$0xff]
    %v244 = vld [vmem:[#allocation2 + $0x6e8] sm:$0xff]
    %v245 = vld [vmem:[#allocation2 + $0x6f0] sm:$0xff]
    %v246 = vld [vmem:[#allocation2 + $0x6f8] sm:$0xff]
    %v247 = vld [vmem:[#allocation2 + $0x700] sm:$0xff]
    %v248 = vld [vmem:[#allocation2 + $0x708] sm:$0xff]
    %v249 = vld [vmem:[#allocation2 + $0x710] sm:$0xff]
    %v250 = vld [vmem:[#allocation2 + $0x718] sm:$0xff]
    %v251 = vld [vmem:[#allocation2 + $0x720] sm:$0xff]
    %v252 = vld [vmem:[#allocation2 + $0x728] sm:$0xff]
    %v253 = vld [vmem:[#allocation2 + $0x730] sm:$0xff]
    %v254 = vld [vmem:[#allocation2 + $0x738] sm:$0xff]
    %v255 = vld [vmem:[#allocation2 + $0x740] sm:$0xff]
    %v256 = vld [vmem:[#allocation2 + $0x748] sm:$0xff]
    %v257 = vld [vmem:[#allocation2 + $0x750] sm:$0xff]
    %v258 = vld [vmem:[#allocation2 + $0x758] sm:$0xff]
    %v259 = vld [vmem:[#allocation2 + $0x760] sm:$0xff]
    %v260 = vld [vmem:[#allocation2 + $0x768] sm:$0xff]
    %v261 = vld [vmem:[#allocation2 + $0x770] sm:$0xff]
    %v262 = vld [vmem:[#allocation2 + $0x778] sm:$0xff]
    %v263 = vld [vmem:[#allocation2 + $0x780] sm:$0xff]
    %v264 = vld [vmem:[#allocation2 + $0x788] sm:$0xff]
    %v265 = vld [vmem:[#allocation2 + $0x790] sm:$0xff]
    %v266 = vld [vmem:[#allocation2 + $0x798] sm:$0xff]
    %v267 = vld [vmem:[#allocation2 + $0x7a0] sm:$0xff]
    %v268 = vld [vmem:[#allocation2 + $0x7a8] sm:$0xff]
    %v269 = vld [vmem:[#allocation2 + $0x7b0] sm:$0xff]
    %v270 = vld [vmem:[#allocation2 + $0x7b8] sm:$0xff]
    %v271 = vld [vmem:[#allocation2 + $0x7c0] sm:$0xff]
    %v272 = vld [vmem:[#allocation2 + $0x7c8] sm:$0xff]
    %v273 = vld [vmem:[#allocation2 + $0x7d0] sm:$0xff]
    %v274 = vld [vmem:[#allocation2 + $0x7d8] sm:$0xff]
    %v275 = vld [vmem:[#allocation2 + $0x7e0] sm:$0xff]
    %v276 = vld [vmem:[#allocation2 + $0x7e8] sm:$0xff]
    %v277 = vld [vmem:[#allocation2 + $0x7f0] sm:$0xff]
    %v278 = vld [vmem:[#allocation2 + $0x7f8] sm:$0xff]
    %v279 = vld [vmem:[#allocation2 + $0x800] sm:$0xff]
    %v280 = vld [vmem:[#allocation2 + $0x808] sm:$0xff]
    %v281 = vld [vmem:[#allocation2 + $0x810] sm:$0xff]
    %v282 = vld [vmem:[#allocation2 + $0x818] sm:$0xff]
    %v283 = vld [vmem:[#allocation2 + $0x820] sm:$0xff]
    %v284 = vld [vmem:[#allocation2 + $0x828] sm:$0xff]
    %v285 = vld [vmem:[#allocation2 + $0x830] sm:$0xff]
    %v286 = vld [vmem:[#allocation2 + $0x838] sm:$0xff]
    %v287 = vld [vmem:[#allocation2 + $0x840] sm:$0xff]
    %v288 = vld [vmem:[#allocation2 + $0x848] sm:$0xff]
    %v289 = vld [vmem:[#allocation2 + $0x850] sm:$0xff]
    %v290 = vld [vmem:[#allocation2 + $0x858] sm:$0xff]
    %v291 = vld [vmem:[#allocation2 + $0x860] sm:$0xff]
    %v292 = vld [vmem:[#allocation2 + $0x868] sm:$0xff]
    %v293 = vld [vmem:[#allocation2 + $0x870] sm:$0xff]
    %v294 = vld [vmem:[#allocation2 + $0x878] sm:$0xff]
    %v295 = vld [vmem:[#allocation2 + $0x880] sm:$0xff]
    %v296 = vld [vmem:[#allocation2 + $0x888] sm:$0xff]
    %v297 = vld [vmem:[#allocation2 + $0x890] sm:$0xff]
    %v298 = vld [vmem:[#allocation2 + $0x898] sm:$0xff]
    %v299 = vld [vmem:[#allocation2 + $0x8a0] sm:$0xff]
    %v300 = vld [vmem:[#allocation2 + $0x8a8] sm:$0xff]
    %v301 = vld [vmem:[#allocation2 + $0x8b0] sm:$0xff]
    %v302 = vld [vmem:[#allocation2 + $0x8b8] sm:$0xff]
    %v303 = vld [vmem:[#allocation2 + $0x8c0] sm:$0xff]
    %v304 = vld [vmem:[#allocation2 + $0x8c8] sm:$0xff]
    %v305 = vld [vmem:[#allocation2 + $0x8d0] sm:$0xff]
    %v306 = vld [vmem:[#allocation2 + $0x8d8] sm:$0xff]
    %v307 = vld [vmem:[#allocation2 + $0x8e0] sm:$0xff]
    %v308 = vld [vmem:[#allocation2 + $0x8e8] sm:$0xff]
    %v309 = vld [vmem:[#allocation2 + $0x8f0] sm:$0xff]
    %v310 = vld [vmem:[#allocation2 + $0x8f8] sm:$0xff]
    %v311 = vld [vmem:[#allocation2 + $0x900] sm:$0xff]
    %v312 = vld [vmem:[#allocation2 + $0x908] sm:$0xff]
    %v313 = vld [vmem:[#allocation2 + $0x910] sm:$0xff]
    %v314 = vld [vmem:[#allocation2 + $0x918] sm:$0xff]
    %v315 = vld [vmem:[#allocation2 + $0x920] sm:$0xff]
    %v316 = vld [vmem:[#allocation2 + $0x928] sm:$0xff]
    %v317 = vld [vmem:[#allocation2 + $0x930] sm:$0xff]
    %v318 = vld [vmem:[#allocation2 + $0x938] sm:$0xff]
    %v319 = vld [vmem:[#allocation2 + $0x940] sm:$0xff]
    %v320 = vld [vmem:[#allocation2 + $0x948] sm:$0xff]
    %v321 = vld [vmem:[#allocation2 + $0x950] sm:$0xff]
    %v322 = vld [vmem:[#allocation2 + $0x958] sm:$0xff]
    %v323 = vld [vmem:[#allocation2 + $0x960] sm:$0xff]
    %v324 = vld [vmem:[#allocation2 + $0x968] sm:$0xff]
    %v325 = vld [vmem:[#allocation2 + $0x970] sm:$0xff]
    %v326 = vld [vmem:[#allocation2 + $0x978] sm:$0xff]
    %v327 = vld [vmem:[#allocation2 + $0x980] sm:$0xff]
    %v328 = vld [vmem:[#allocation2 + $0x988] sm:$0xff]
    %v329 = vld [vmem:[#allocation2 + $0x990] sm:$0xff]
    %v330 = vld [vmem:[#allocation2 + $0x998] sm:$0xff]
    %v331 = vld [vmem:[#allocation2 + $0x9a0] sm:$0xff]
    %v332 = vld [vmem:[#allocation2 + $0x9a8] sm:$0xff]
    %v333 = vld [vmem:[#allocation2 + $0x9b0] sm:$0xff]
    %v334 = vld [vmem:[#allocation2 + $0x9b8] sm:$0xff]
    %v335 = vld [vmem:[#allocation2 + $0x9c0] sm:$0xff]
    %v336 = vld [vmem:[#allocation2 + $0x9c8] sm:$0xff]
    %v337 = vld [vmem:[#allocation2 + $0x9d0] sm:$0xff]
    %v338 = vld [vmem:[#allocation2 + $0x9d8] sm:$0xff]
    %v339 = vld [vmem:[#allocation2 + $0x9e0] sm:$0xff]
    %v340 = vld [vmem:[#allocation2 + $0x9e8] sm:$0xff]
    %v341 = vld [vmem:[#allocation2 + $0x9f0] sm:$0xff]
    %v342 = vld [vmem:[#allocation2 + $0x9f8] sm:$0xff]
    %v343 = vld [vmem:[#allocation2 + $0xa00] sm:$0xff]
    %v344 = vld [vmem:[#allocation2 + $0xa08] sm:$0xff]
    %v345 = vld [vmem:[#allocation2 + $0xa10] sm:$0xff]
    %v346 = vld [vmem:[#allocation2 + $0xa18] sm:$0xff]
    %v347 = vld [vmem:[#allocation2 + $0xa20] sm:$0xff]
    %v348 = vld [vmem:[#allocation2 + $0xa28] sm:$0xff]
    %v349 = vld [vmem:[#allocation2 + $0xa30] sm:$0xff]
    %v350 = vld [vmem:[#allocation2 + $0xa38] sm:$0xff]
    %v351 = vld [vmem:[#allocation2 + $0xa40] sm:$0xff]
    %v352 = vld [vmem:[#allocation2 + $0xa48] sm:$0xff]
    %v353 = vld [vmem:[#allocation2 + $0xa50] sm:$0xff]
    %v354 = vld [vmem:[#allocation2 + $0xa58] sm:$0xff]
    %v355 = vld [vmem:[#allocation2 + $0xa60] sm:$0xff]
    %v356 = vld [vmem:[#allocation2 + $0xa68] sm:$0xff]
    %v357 = vld [vmem:[#allocation2 + $0xa70] sm:$0xff]
    %v358 = vld [vmem:[#allocation2 + $0xa78] sm:$0xff]
    %v359 = vld [vmem:[#allocation2 + $0xa80] sm:$0xff]
    %v360 = vld [vmem:[#allocation2 + $0xa88] sm:$0xff]
    %v361 = vld [vmem:[#allocation2 + $0xa90] sm:$0xff]
    %v362 = vld [vmem:[#allocation2 + $0xa98] sm:$0xff]
    %v363 = vld [vmem:[#allocation2 + $0xaa0] sm:$0xff]
    %v364 = vld [vmem:[#allocation2 + $0xaa8] sm:$0xff]
    %v365 = vld [vmem:[#allocation2 + $0xab0] sm:$0xff]
    %v366 = vld [vmem:[#allocation2 + $0xab8] sm:$0xff]
    %v367 = vld [vmem:[#allocation2 + $0xac0] sm:$0xff]
    %v368 = vld [vmem:[#allocation2 + $0xac8] sm:$0xff]
    %v369 = vld [vmem:[#allocation2 + $0xad0] sm:$0xff]
    %v370 = vld [vmem:[#allocation2 + $0xad8] sm:$0xff]
    %v371 = vld [vmem:[#allocation2 + $0xae0] sm:$0xff]
    %v372 = vld [vmem:[#allocation2 + $0xae8] sm:$0xff]
    %v373 = vld [vmem:[#allocation2 + $0xaf0] sm:$0xff]
    %v374 = vld [vmem:[#allocation2 + $0xaf8] sm:$0xff]
    %v375 = vld [vmem:[#allocation2 + $0xb00] sm:$0xff]
    %v376 = vld [vmem:[#allocation2 + $0xb08] sm:$0xff]
    %v377 = vld [vmem:[#allocation2 + $0xb10] sm:$0xff]
    %v378 = vld [vmem:[#allocation2 + $0xb18] sm:$0xff]
    %v379 = vld [vmem:[#allocation2 + $0xb20] sm:$0xff]
    %v380 = vld [vmem:[#allocation2 + $0xb28] sm:$0xff]
    %v381 = vld [vmem:[#allocation2 + $0xb30] sm:$0xff]
    %v382 = vld [vmem:[#allocation2 + $0xb38] sm:$0xff]
    %v383 = vld [vmem:[#allocation2 + $0xb40] sm:$0xff]
    %v384 = vld [vmem:[#allocation2 + $0xb48] sm:$0xff]
    %v385 = vld [vmem:[#allocation2 + $0xb50] sm:$0xff]
    %v386 = vld [vmem:[#allocation2 + $0xb58] sm:$0xff]
    %v387 = vld [vmem:[#allocation2 + $0xb60] sm:$0xff]
    %v388 = vld [vmem:[#allocation2 + $0xb68] sm:$0xff]
    %v389 = vld [vmem:[#allocation2 + $0xb70] sm:$0xff]
    %v390 = vld [vmem:[#allocation2 + $0xb78] sm:$0xff]
    %v391 = vld [vmem:[#allocation2 + $0xb80] sm:$0xff]
    %v392 = vld [vmem:[#allocation2 + $0xb88] sm:$0xff]
    %v393 = vld [vmem:[#allocation2 + $0xb90] sm:$0xff]
    %v394 = vld [vmem:[#allocation2 + $0xb98] sm:$0xff]
    %v395 = vld [vmem:[#allocation2 + $0xba0] sm:$0xff]
    %v396 = vld [vmem:[#allocation2 + $0xba8] sm:$0xff]
    %v397 = vld [vmem:[#allocation2 + $0xbb0] sm:$0xff]
    %v398 = vld [vmem:[#allocation2 + $0xbb8] sm:$0xff]
    %v399 = vld [vmem:[#allocation2 + $0xbc0] sm:$0xff]
    %v400 = vld [vmem:[#allocation2 + $0xbc8] sm:$0xff]
    %v401 = vld [vmem:[#allocation2 + $0xbd0] sm:$0xff]
    %v402 = vld [vmem:[#allocation2 + $0xbd8] sm:$0xff]
    %v403 = vld [vmem:[#allocation2 + $0xbe0] sm:$0xff]
    %v404 = vld [vmem:[#allocation2 + $0xbe8] sm:$0xff]
    %v405 = vld [vmem:[#allocation2 + $0xbf0] sm:$0xff]
    %v406 = vld [vmem:[#allocation2 + $0xbf8] sm:$0xff]
    %v407 = vld [vmem:[#allocation2 + $0xc00] sm:$0xff]
    %v408 = vld [vmem:[#allocation2 + $0xc08] sm:$0xff]
    %v409 = vld [vmem:[#allocation2 + $0xc10] sm:$0xff]
    %v410 = vld [vmem:[#allocation2 + $0xc18] sm:$0xff]
    %v411 = vld [vmem:[#allocation2 + $0xc20] sm:$0xff]
    %v412 = vld [vmem:[#allocation2 + $0xc28] sm:$0xff]
    %v413 = vld [vmem:[#allocation2 + $0xc30] sm:$0xff]
    %v414 = vld [vmem:[#allocation2 + $0xc38] sm:$0xff]
    %v415 = vld [vmem:[#allocation2 + $0xc40] sm:$0xff]
    %v416 = vld [vmem:[#allocation2 + $0xc48] sm:$0xff]
    %v417 = vld [vmem:[#allocation2 + $0xc50] sm:$0xff]
    %v418 = vld [vmem:[#allocation2 + $0xc58] sm:$0xff]
    %v419 = vld [vmem:[#allocation2 + $0xc60] sm:$0xff]
    %v420 = vld [vmem:[#allocation2 + $0xc68] sm:$0xff]
    %v421 = vld [vmem:[#allocation2 + $0xc70] sm:$0xff]
    %v422 = vld [vmem:[#allocation2 + $0xc78] sm:$0xff]
    %v423 = vld [vmem:[#allocation2 + $0xc80] sm:$0xff]
    %v424 = vld [vmem:[#allocation2 + $0xc88] sm:$0xff]
    %v425 = vld [vmem:[#allocation2 + $0xc90] sm:$0xff]
    %v426 = vld [vmem:[#allocation2 + $0xc98] sm:$0xff]
    %v427 = vld [vmem:[#allocation2 + $0xca0] sm:$0xff]
    %v428 = vld [vmem:[#allocation2 + $0xca8] sm:$0xff]
    %v429 = vld [vmem:[#allocation2 + $0xcb0] sm:$0xff]
    %v430 = vld [vmem:[#allocation2 + $0xcb8] sm:$0xff]
    %v431 = vmax.f32 %v23, 0.0
    %v432 = vmax.f32 %v24, 0.0
    %v433 = vmax.f32 %v25, 0.0
    %v434 = vmax.f32 %v26, 0.0
    %v435 = vmax.f32 %v27, 0.0
    %v436 = vmax.f32 %v28, 0.0
    %v437 = vmax.f32 %v29, 0.0
    %v438 = vmax.f32 %v30, 0.0
    %v439 = vmax.f32 %v31, 0.0
    %v440 = vmax.f32 %v32, 0.0
    %v441 = vmax.f32 %v33, 0.0
    %v442 = vmax.f32 %v34, 0.0
    %v443 = vmax.f32 %v35, 0.0
    %v444 = vmax.f32 %v36, 0.0
    %v445 = vmax.f32 %v37, 0.0
    %v446 = vmax.f32 %v38, 0.0
    %v447 = vmax.f32 %v39, 0.0
    %v448 = vmax.f32 %v40, 0.0
    %v449 = vmax.f32 %v41, 0.0
    %v450 = vmax.f32 %v42, 0.0
    %v451 = vmax.f32 %v43, 0.0
    %v452 = vmax.f32 %v44, 0.0
    %v453 = vmax.f32 %v45, 0.0
    %v454 = vmax.f32 %v46, 0.0
    %v455 = vmax.f32 %v47, 0.0
    %v456 = vmax.f32 %v48, 0.0
    %v457 = vmax.f32 %v49, 0.0
    %v458 = vmax.f32 %v50, 0.0
    %v459 = vmax.f32 %v51, 0.0
    %v460 = vmax.f32 %v52, 0.0
    %v461 = vmax.f32 %v53, 0.0
    %v462 = vmax.f32 %v54, 0.0
    %v463 = vmax.f32 %v55, 0.0
    %v464 = vmax.f32 %v56, 0.0
    %v465 = vmax.f32 %v57, 0.0
    %v466 = vmax.f32 %v58, 0.0
    %v467 = vmax.f32 %v59, 0.0
    %v468 = vmax.f32 %v60, 0.0
    %v469 = vmax.f32 %v61, 0.0
    %v470 = vmax.f32 %v62, 0.0
    %v471 = vmax.f32 %v63, 0.0
    %v472 = vmax.f32 %v64, 0.0
    %v473 = vmax.f32 %v65, 0.0
    %v474 = vmax.f32 %v66, 0.0
    %v475 = vmax.f32 %v67, 0.0
    %v476 = vmax.f32 %v68, 0.0
    %v477 = vmax.f32 %v69, 0.0
    %v478 = vmax.f32 %v70, 0.0
    %v479 = vmax.f32 %v71, 0.0
    %v480 = vmax.f32 %v72, 0.0
    %v481 = vmax.f32 %v73, 0.0
    %v482 = vmax.f32 %v74, 0.0
    %v483 = vmax.f32 %v75, 0.0
    %v484 = vmax.f32 %v76, 0.0
    %v485 = vmax.f32 %v77, 0.0
    %v486 = vmax.f32 %v78, 0.0
    %v487 = vmax.f32 %v79, 0.0
    %v488 = vmax.f32 %v80, 0.0
    %v489 = vmax.f32 %v81, 0.0
    %v490 = vmax.f32 %v82, 0.0
    %v491 = vmax.f32 %v83, 0.0
    %v492 = vmax.f32 %v84, 0.0
    %v493 = vmax.f32 %v85, 0.0
    %v494 = vmax.f32 %v86, 0.0
    %v495 = vmax.f32 %v87, 0.0
    %v496 = vmax.f32 %v88, 0.0
    %v497 = vmax.f32 %v89, 0.0
    %v498 = vmax.f32 %v90, 0.0
    %v499 = vmax.f32 %v91, 0.0
    %v500 = vmax.f32 %v92, 0.0
    %v501 = vmax.f32 %v93, 0.0
    %v502 = vmax.f32 %v94, 0.0
    %v503 = vmax.f32 %v95, 0.0
    %v504 = vmax.f32 %v96, 0.0
    %v505 = vmax.f32 %v97, 0.0
    %v506 = vmax.f32 %v98, 0.0
    %v507 = vmax.f32 %v99, 0.0
    %v508 = vmax.f32 %v100, 0.0
    %v509 = vmax.f32 %v101, 0.0
    %v510 = vmax.f32 %v102, 0.0
    %v511 = vmax.f32 %v103, 0.0
    %v512 = vmax.f32 %v104, 0.0
    %v513 = vmax.f32 %v105, 0.0
    %v514 = vmax.f32 %v106, 0.0
    %v515 = vmax.f32 %v107, 0.0
    %v516 = vmax.f32 %v108, 0.0
    %v517 = vmax.f32 %v109, 0.0
    %v518 = vmax.f32 %v110, 0.0
    %v519 = vmax.f32 %v111, 0.0
    %v520 = vmax.f32 %v112, 0.0
    %v521 = vmax.f32 %v113, 0.0
    %v522 = vmax.f32 %v114, 0.0
    %v523 = vmax.f32 %v115, 0.0
    %v524 = vmax.f32 %v116, 0.0
    %v525 = vmax.f32 %v117, 0.0
    %v526 = vmax.f32 %v118, 0.0
    %v527 = vmax.f32 %v119, 0.0
    %v528 = vmax.f32 %v120, 0.0
    %v529 = vmax.f32 %v121, 0.0
    %v530 = vmax.f32 %v122, 0.0
    %v531 = vmax.f32 %v123, 0.0
    %v532 = vmax.f32 %v124, 0.0
    %v533 = vmax.f32 %v125, 0.0
    %v534 = vmax.f32 %v126, 0.0
    %v535 = vmax.f32 %v127, 0.0
    %v536 = vmax.f32 %v128, 0.0
    %v537 = vmax.f32 %v129, 0.0
    %v538 = vmax.f32 %v130, 0.0
    %v539 = vmax.f32 %v131, 0.0
    %v540 = vmax.f32 %v132, 0.0
    %v541 = vmax.f32 %v133, 0.0
    %v542 = vmax.f32 %v134, 0.0
    %v543 = vmax.f32 %v135, 0.0
    %v544 = vmax.f32 %v136, 0.0
    %v545 = vmax.f32 %v137, 0.0
    %v546 = vmax.f32 %v138, 0.0
    %v547 = vmax.f32 %v139, 0.0
    %v548 = vmax.f32 %v140, 0.0
    %v549 = vmax.f32 %v141, 0.0
    %v550 = vmax.f32 %v142, 0.0
    %v551 = vmax.f32 %v143, 0.0
    %v552 = vmax.f32 %v144, 0.0
    %v553 = vmax.f32 %v145, 0.0
    %v554 = vmax.f32 %v146, 0.0
    %v555 = vmax.f32 %v147, 0.0
    %v556 = vmax.f32 %v148, 0.0
    %v557 = vmax.f32 %v149, 0.0
    %v558 = vmax.f32 %v150, 0.0
    %v559 = vmax.f32 %v151, 0.0
    %v560 = vmax.f32 %v152, 0.0
    %v561 = vmax.f32 %v153, 0.0
    %v562 = vmax.f32 %v154, 0.0
    %v563 = vmax.f32 %v155, 0.0
    %v564 = vmax.f32 %v156, 0.0
    %v565 = vmax.f32 %v157, 0.0
    %v566 = vmax.f32 %v158, 0.0
    %v567 = vmax.f32 %v159, 0.0
    %v568 = vmax.f32 %v160, 0.0
    %v569 = vmax.f32 %v161, 0.0
    %v570 = vmax.f32 %v162, 0.0
    %v571 = vmax.f32 %v163, 0.0
    %v572 = vmax.f32 %v164, 0.0
    %v573 = vmax.f32 %v165, 0.0
    %v574 = vmax.f32 %v166, 0.0
    %v575 = vmax.f32 %v167, 0.0
    %v576 = vmax.f32 %v168, 0.0
    %v577 = vmax.f32 %v169, 0.0
    %v578 = vmax.f32 %v170, 0.0
    %v579 = vmax.f32 %v171, 0.0
    %v580 = vmax.f32 %v172, 0.0
    %v581 = vmax.f32 %v173, 0.0
    %v582 = vmax.f32 %v174, 0.0
    %v583 = vmax.f32 %v175, 0.0
    %v584 = vmax.f32 %v176, 0.0
    %v585 = vmax.f32 %v177, 0.0
    %v586 = vmax.f32 %v178, 0.0
    %v587 = vmax.f32 %v179, 0.0
    %v588 = vmax.f32 %v180, 0.0
    %v589 = vmax.f32 %v181, 0.0
    %v590 = vmax.f32 %v182, 0.0
    %v591 = vmax.f32 %v183, 0.0
    %v592 = vmax.f32 %v184, 0.0
    %v593 = vmax.f32 %v185, 0.0
    %v594 = vmax.f32 %v186, 0.0
    %v595 = vmax.f32 %v187, 0.0
    %v596 = vmax.f32 %v188, 0.0
    %v597 = vmax.f32 %v189, 0.0
    %v598 = vmax.f32 %v190, 0.0
    %v599 = vmax.f32 %v191, 0.0
    %v600 = vmax.f32 %v192, 0.0
    %v601 = vmax.f32 %v193, 0.0
    %v602 = vmax.f32 %v194, 0.0
    %v603 = vmax.f32 %v195, 0.0
    %v604 = vmax.f32 %v196, 0.0
    %v605 = vmax.f32 %v197, 0.0
    %v606 = vmax.f32 %v198, 0.0
    %v607 = vmax.f32 %v199, 0.0
    %v608 = vmax.f32 %v200, 0.0
    %v609 = vmax.f32 %v201, 0.0
    %v610 = vmax.f32 %v202, 0.0
    %v611 = vmax.f32 %v203, 0.0
    %v612 = vmax.f32 %v204, 0.0
    %v613 = vmax.f32 %v205, 0.0
    %v614 = vmax.f32 %v206, 0.0
    %v615 = vmax.f32 %v207, 0.0
    %v616 = vmax.f32 %v208, 0.0
    %v617 = vmax.f32 %v209, 0.0
    %v618 = vmax.f32 %v210, 0.0
    %v619 = vmax.f32 %v211, 0.0
    %v620 = vmax.f32 %v212, 0.0
    %v621 = vmax.f32 %v213, 0.0
    %v622 = vmax.f32 %v214, 0.0
    %v623 = vmax.f32 %v215, 0.0
    %v624 = vmax.f32 %v216, 0.0
    %v625 = vmax.f32 %v217, 0.0
    %v626 = vmax.f32 %v218, 0.0
    %v627 = vmax.f32 %v219, 0.0
    %v628 = vmax.f32 %v220, 0.0
    %v629 = vmax.f32 %v221, 0.0
    %v630 = vmax.f32 %v222, 0.0
    %v631 = vmax.f32 %v223, 0.0
    %v632 = vmax.f32 %v224, 0.0
    %v633 = vmax.f32 %v225, 0.0
    %v634 = vmax.f32 %v226, 0.0
    %v635 = vmax.f32 %v227, 0.0
    %v636 = vmax.f32 %v228, 0.0
    %v637 = vmax.f32 %v229, 0.0
    %v638 = vmax.f32 %v230, 0.0
    %v639 = vmax.f32 %v231, 0.0
    %v640 = vmax.f32 %v232, 0.0
    %v641 = vmax.f32 %v233, 0.0
    %v642 = vmax.f32 %v234, 0.0
    %v643 = vmax.f32 %v235, 0.0
    %v644 = vmax.f32 %v236, 0.0
    %v645 = vmax.f32 %v237, 0.0
    %v646 = vmax.f32 %v238, 0.0
    %v647 = vmax.f32 %v239, 0.0
    %v648 = vmax.f32 %v240, 0.0
    %v649 = vmax.f32 %v241, 0.0
    %v650 = vmax.f32 %v242, 0.0
    %v651 = vmax.f32 %v243, 0.0
    %v652 = vmax.f32 %v244, 0.0
    %v653 = vmax.f32 %v245, 0.0
    %v654 = vmax.f32 %v246, 0.0
    %v655 = vmax.f32 %v247, 0.0
    %v656 = vmax.f32 %v248, 0.0
    %v657 = vmax.f32 %v249, 0.0
    %v658 = vmax.f32 %v250, 0.0
    %v659 = vmax.f32 %v251, 0.0
    %v660 = vmax.f32 %v252, 0.0
    %v661 = vmax.f32 %v253, 0.0
    %v662 = vmax.f32 %v254, 0.0
    %v663 = vmax.f32 %v255, 0.0
    %v664 = vmax.f32 %v256, 0.0
    %v665 = vmax.f32 %v257, 0.0
    %v666 = vmax.f32 %v258, 0.0
    %v667 = vmax.f32 %v259, 0.0
    %v668 = vmax.f32 %v260, 0.0
    %v669 = vmax.f32 %v261, 0.0
    %v670 = vmax.f32 %v262, 0.0
    %v671 = vmax.f32 %v263, 0.0
    %v672 = vmax.f32 %v264, 0.0
    %v673 = vmax.f32 %v265, 0.0
    %v674 = vmax.f32 %v266, 0.0
    %v675 = vmax.f32 %v267, 0.0
    %v676 = vmax.f32 %v268, 0.0
    %v677 = vmax.f32 %v269, 0.0
    %v678 = vmax.f32 %v270, 0.0
    %v679 = vmax.f32 %v271, 0.0
    %v680 = vmax.f32 %v272, 0.0
    %v681 = vmax.f32 %v273, 0.0
    %v682 = vmax.f32 %v274, 0.0
    %v683 = vmax.f32 %v275, 0.0
    %v684 = vmax.f32 %v276, 0.0
    %v685 = vmax.f32 %v277, 0.0
    %v686 = vmax.f32 %v278, 0.0
    %v687 = vmax.f32 %v279, 0.0
    %v688 = vmax.f32 %v280, 0.0
    %v689 = vmax.f32 %v281, 0.0
    %v690 = vmax.f32 %v282, 0.0
    %v691 = vmax.f32 %v283, 0.0
    %v692 = vmax.f32 %v284, 0.0
    %v693 = vmax.f32 %v285, 0.0
    %v694 = vmax.f32 %v286, 0.0
    %v695 = vmax.f32 %v287, 0.0
    %v696 = vmax.f32 %v288, 0.0
    %v697 = vmax.f32 %v289, 0.0
    %v698 = vmax.f32 %v290, 0.0
    %v699 = vmax.f32 %v291, 0.0
    %v700 = vmax.f32 %v292, 0.0
    %v701 = vmax.f32 %v293, 0.0
    %v702 = vmax.f32 %v294, 0.0
    %v703 = vmax.f32 %v295, 0.0
    %v704 = vmax.f32 %v296, 0.0
    %v705 = vmax.f32 %v297, 0.0
    %v706 = vmax.f32 %v298, 0.0
    %v707 = vmax.f32 %v299, 0.0
    %v708 = vmax.f32 %v300, 0.0
    %v709 = vmax.f32 %v301, 0.0
    %v710 = vmax.f32 %v302, 0.0
    %v711 = vmax.f32 %v303, 0.0
    %v712 = vmax.f32 %v304, 0.0
    %v713 = vmax.f32 %v305, 0.0
    %v714 = vmax.f32 %v306, 0.0
    %v715 = vmax.f32 %v307, 0.0
    %v716 = vmax.f32 %v308, 0.0
    %v717 = vmax.f32 %v309, 0.0
    %v718 = vmax.f32 %v310, 0.0
    %v719 = vmax.f32 %v311, 0.0
    %v720 = vmax.f32 %v312, 0.0
    %v721 = vmax.f32 %v313, 0.0
    %v722 = vmax.f32 %v314, 0.0
    %v723 = vmax.f32 %v315, 0.0
    %v724 = vmax.f32 %v316, 0.0
    %v725 = vmax.f32 %v317, 0.0
    %v726 = vmax.f32 %v318, 0.0
    %v727 = vmax.f32 %v319, 0.0
    %v728 = vmax.f32 %v320, 0.0
    %v729 = vmax.f32 %v321, 0.0
    %v730 = vmax.f32 %v322, 0.0
    %v731 = vmax.f32 %v323, 0.0
    %v732 = vmax.f32 %v324, 0.0
    %v733 = vmax.f32 %v325, 0.0
    %v734 = vmax.f32 %v326, 0.0
    %v735 = vmax.f32 %v327, 0.0
    %v736 = vmax.f32 %v328, 0.0
    %v737 = vmax.f32 %v329, 0.0
    %v738 = vmax.f32 %v330, 0.0
    %v739 = vmax.f32 %v331, 0.0
    %v740 = vmax.f32 %v332, 0.0
    %v741 = vmax.f32 %v333, 0.0
    %v742 = vmax.f32 %v334, 0.0
    %v743 = vmax.f32 %v335, 0.0
    %v744 = vmax.f32 %v336, 0.0
    %v745 = vmax.f32 %v337, 0.0
    %v746 = vmax.f32 %v338, 0.0
    %v747 = vmax.f32 %v339, 0.0
    %v748 = vmax.f32 %v340, 0.0
    %v749 = vmax.f32 %v341, 0.0
    %v750 = vmax.f32 %v342, 0.0
    %v751 = vmax.f32 %v343, 0.0
    %v752 = vmax.f32 %v344, 0.0
    %v753 = vmax.f32 %v345, 0.0
    %v754 = vmax.f32 %v346, 0.0
    %v755 = vmax.f32 %v347, 0.0
    %v756 = vmax.f32 %v348, 0.0
    %v757 = vmax.f32 %v349, 0.0
    %v758 = vmax.f32 %v350, 0.0
    %v759 = vmax.f32 %v351, 0.0
    %v760 = vmax.f32 %v352, 0.0
    %v761 = vmax.f32 %v353, 0.0
    %v762 = vmax.f32 %v354, 0.0
    %v763 = vmax.f32 %v355, 0.0
    %v764 = vmax.f32 %v356, 0.0
    %v765 = vmax.f32 %v357, 0.0
    %v766 = vmax.f32 %v358, 0.0
    %v767 = vmax.f32 %v359, 0.0
    %v768 = vmax.f32 %v360, 0.0
    %v769 = vmax.f32 %v361, 0.0
    %v770 = vmax.f32 %v362, 0.0
    %v771 = vmax.f32 %v363, 0.0
    %v772 = vmax.f32 %v364, 0.0
    %v773 = vmax.f32 %v365, 0.0
    %v774 = vmax.f32 %v366, 0.0
    %v775 = vmax.f32 %v367, 0.0
    %v776 = vmax.f32 %v368, 0.0
    %v777 = vmax.f32 %v369, 0.0
    %v778 = vmax.f32 %v370, 0.0
    %v779 = vmax.f32 %v371, 0.0
    %v780 = vmax.f32 %v372, 0.0
    %v781 = vmax.f32 %v373, 0.0
    %v782 = vmax.f32 %v374, 0.0
    %v783 = vmax.f32 %v375, 0.0
    %v784 = vmax.f32 %v376, 0.0
    %v785 = vmax.f32 %v377, 0.0
    %v786 = vmax.f32 %v378, 0.0
    %v787 = vmax.f32 %v379, 0.0
    %v788 = vmax.f32 %v380, 0.0
    %v789 = vmax.f32 %v381, 0.0
    %v790 = vmax.f32 %v382, 0.0
    %v791 = vmax.f32 %v383, 0.0
    %v792 = vmax.f32 %v384, 0.0
    %v793 = vmax.f32 %v385, 0.0
    %v794 = vmax.f32 %v386, 0.0
    %v795 = vmax.f32 %v387, 0.0
    %v796 = vmax.f32 %v388, 0.0
    %v797 = vmax.f32 %v389, 0.0
    %v798 = vmax.f32 %v390, 0.0
    %v799 = vmax.f32 %v391, 0.0
    %v800 = vmax.f32 %v392, 0.0
    %v801 = vmax.f32 %v393, 0.0
    %v802 = vmax.f32 %v394, 0.0
    %v803 = vmax.f32 %v395, 0.0
    %v804 = vmax.f32 %v396, 0.0
    %v805 = vmax.f32 %v397, 0.0
    %v806 = vmax.f32 %v398, 0.0
    %v807 = vmax.f32 %v399, 0.0
    %v808 = vmax.f32 %v400, 0.0
    %v809 = vmax.f32 %v401, 0.0
    %v810 = vmax.f32 %v402, 0.0
    %v811 = vmax.f32 %v403, 0.0
    %v812 = vmax.f32 %v404, 0.0
    %v813 = vmax.f32 %v405, 0.0
    %v814 = vmax.f32 %v406, 0.0
    %v815 = vmax.f32 %v407, 0.0
    %v816 = vmax.f32 %v408, 0.0
    %v817 = vmax.f32 %v409, 0.0
    %v818 = vmax.f32 %v410, 0.0
    %v819 = vmax.f32 %v411, 0.0
    %v820 = vmax.f32 %v412, 0.0
    %v821 = vmax.f32 %v413, 0.0
    %v822 = vmax.f32 %v414, 0.0
    %v823 = vmax.f32 %v415, 0.0
    %v824 = vmax.f32 %v416, 0.0
    %v825 = vmax.f32 %v417, 0.0
    %v826 = vmax.f32 %v418, 0.0
    %v827 = vmax.f32 %v419, 0.0
    %v828 = vmax.f32 %v420, 0.0
    %v829 = vmax.f32 %v421, 0.0
    %v830 = vmax.f32 %v422, 0.0
    %v831 = vmax.f32 %v423, 0.0
    %v832 = vmax.f32 %v424, 0.0
    %v833 = vmax.f32 %v425, 0.0
    %v834 = vmax.f32 %v426, 0.0
    %v835 = vmax.f32 %v427, 0.0
    %v836 = vmax.f32 %v428, 0.0
    %v837 = vmax.f32 %v429, 0.0
    %v838 = vmax.f32 %v430, 0.0
    %839 = vst [vmem:[#allocation5] sm:$0xff] %v431
    %840 = vst [vmem:[#allocation5 + $0x8] sm:$0xff] %v432
    %841 = vst [vmem:[#allocation5 + $0x10] sm:$0xff] %v433
    %842 = vst [vmem:[#allocation5 + $0x18] sm:$0xff] %v434
    %843 = vst [vmem:[#allocation5 + $0x20] sm:$0xff] %v435
    %844 = vst [vmem:[#allocation5 + $0x28] sm:$0xff] %v436
    %845 = vst [vmem:[#allocation5 + $0x30] sm:$0xff] %v437
    %846 = vst [vmem:[#allocation5 + $0x38] sm:$0xff] %v438
    %847 = vst [vmem:[#allocation5 + $0x40] sm:$0xff] %v439
    %848 = vst [vmem:[#allocation5 + $0x48] sm:$0xff] %v440
    %849 = vst [vmem:[#allocation5 + $0x50] sm:$0xff] %v441
    %850 = vst [vmem:[#allocation5 + $0x58] sm:$0xff] %v442
    %851 = vst [vmem:[#allocation5 + $0x60] sm:$0xff] %v443
    %852 = vst [vmem:[#allocation5 + $0x68] sm:$0xff] %v444
    %853 = vst [vmem:[#allocation5 + $0x70] sm:$0xff] %v445
    %854 = vst [vmem:[#allocation5 + $0x78] sm:$0xff] %v446
    %855 = vst [vmem:[#allocation5 + $0x80] sm:$0xff] %v447
    %856 = vst [vmem:[#allocation5 + $0x88] sm:$0xff] %v448
    %857 = vst [vmem:[#allocation5 + $0x90] sm:$0xff] %v449
    %858 = vst [vmem:[#allocation5 + $0x98] sm:$0xff] %v450
    %859 = vst [vmem:[#allocation5 + $0xa0] sm:$0xff] %v451
    %860 = vst [vmem:[#allocation5 + $0xa8] sm:$0xff] %v452
    %861 = vst [vmem:[#allocation5 + $0xb0] sm:$0xff] %v453
    %862 = vst [vmem:[#allocation5 + $0xb8] sm:$0xff] %v454
    %863 = vst [vmem:[#allocation5 + $0xc0] sm:$0xff] %v455
    %864 = vst [vmem:[#allocation5 + $0xc8] sm:$0xff] %v456
    %865 = vst [vmem:[#allocation5 + $0xd0] sm:$0xff] %v457
    %866 = vst [vmem:[#allocation5 + $0xd8] sm:$0xff] %v458
    %867 = vst [vmem:[#allocation5 + $0xe0] sm:$0xff] %v459
    %868 = vst [vmem:[#allocation5 + $0xe8] sm:$0xff] %v460
    %869 = vst [vmem:[#allocation5 + $0xf0] sm:$0xff] %v461
    %870 = vst [vmem:[#allocation5 + $0xf8] sm:$0xff] %v462
    %871 = vst [vmem:[#allocation5 + $0x100] sm:$0xff] %v463
    %872 = vst [vmem:[#allocation5 + $0x108] sm:$0xff] %v464
    %873 = vst [vmem:[#allocation5 + $0x110] sm:$0xff] %v465
    %874 = vst [vmem:[#allocation5 + $0x118] sm:$0xff] %v466
    %875 = vst [vmem:[#allocation5 + $0x120] sm:$0xff] %v467
    %876 = vst [vmem:[#allocation5 + $0x128] sm:$0xff] %v468
    %877 = vst [vmem:[#allocation5 + $0x130] sm:$0xff] %v469
    %878 = vst [vmem:[#allocation5 + $0x138] sm:$0xff] %v470
    %879 = vst [vmem:[#allocation5 + $0x140] sm:$0xff] %v471
    %880 = vst [vmem:[#allocation5 + $0x148] sm:$0xff] %v472
    %881 = vst [vmem:[#allocation5 + $0x150] sm:$0xff] %v473
    %882 = vst [vmem:[#allocation5 + $0x158] sm:$0xff] %v474
    %883 = vst [vmem:[#allocation5 + $0x160] sm:$0xff] %v475
    %884 = vst [vmem:[#allocation5 + $0x168] sm:$0xff] %v476
    %885 = vst [vmem:[#allocation5 + $0x170] sm:$0xff] %v477
    %886 = vst [vmem:[#allocation5 + $0x178] sm:$0xff] %v478
    %887 = vst [vmem:[#allocation5 + $0x180] sm:$0xff] %v479
    %888 = vst [vmem:[#allocation5 + $0x188] sm:$0xff] %v480
    %889 = vst [vmem:[#allocation5 + $0x190] sm:$0xff] %v481
    %890 = vst [vmem:[#allocation5 + $0x198] sm:$0xff] %v482
    %891 = vst [vmem:[#allocation5 + $0x1a0] sm:$0xff] %v483
    %892 = vst [vmem:[#allocation5 + $0x1a8] sm:$0xff] %v484
    %893 = vst [vmem:[#allocation5 + $0x1b0] sm:$0xff] %v485
    %894 = vst [vmem:[#allocation5 + $0x1b8] sm:$0xff] %v486
    %895 = vst [vmem:[#allocation5 + $0x1c0] sm:$0xff] %v487
    %896 = vst [vmem:[#allocation5 + $0x1c8] sm:$0xff] %v488
    %897 = vst [vmem:[#allocation5 + $0x1d0] sm:$0xff] %v489
    %898 = vst [vmem:[#allocation5 + $0x1d8] sm:$0xff] %v490
    %899 = vst [vmem:[#allocation5 + $0x1e0] sm:$0xff] %v491
    %900 = vst [vmem:[#allocation5 + $0x1e8] sm:$0xff] %v492
    %901 = vst [vmem:[#allocation5 + $0x1f0] sm:$0xff] %v493
    %902 = vst [vmem:[#allocation5 + $0x1f8] sm:$0xff] %v494
    %903 = vst [vmem:[#allocation5 + $0x200] sm:$0xff] %v495
    %904 = vst [vmem:[#allocation5 + $0x208] sm:$0xff] %v496
    %905 = vst [vmem:[#allocation5 + $0x210] sm:$0xff] %v497
    %906 = vst [vmem:[#allocation5 + $0x218] sm:$0xff] %v498
    %907 = vst [vmem:[#allocation5 + $0x220] sm:$0xff] %v499
    %908 = vst [vmem:[#allocation5 + $0x228] sm:$0xff] %v500
    %909 = vst [vmem:[#allocation5 + $0x230] sm:$0xff] %v501
    %910 = vst [vmem:[#allocation5 + $0x238] sm:$0xff] %v502
    %911 = vst [vmem:[#allocation5 + $0x240] sm:$0xff] %v503
    %912 = vst [vmem:[#allocation5 + $0x248] sm:$0xff] %v504
    %913 = vst [vmem:[#allocation5 + $0x250] sm:$0xff] %v505
    %914 = vst [vmem:[#allocation5 + $0x258] sm:$0xff] %v506
    %915 = vst [vmem:[#allocation5 + $0x260] sm:$0xff] %v507
    %916 = vst [vmem:[#allocation5 + $0x268] sm:$0xff] %v508
    %917 = vst [vmem:[#allocation5 + $0x270] sm:$0xff] %v509
    %918 = vst [vmem:[#allocation5 + $0x278] sm:$0xff] %v510
    %919 = vst [vmem:[#allocation5 + $0x280] sm:$0xff] %v511
    %920 = vst [vmem:[#allocation5 + $0x288] sm:$0xff] %v512
    %921 = vst [vmem:[#allocation5 + $0x290] sm:$0xff] %v513
    %922 = vst [vmem:[#allocation5 + $0x298] sm:$0xff] %v514
    %923 = vst [vmem:[#allocation5 + $0x2a0] sm:$0xff] %v515
    %924 = vst [vmem:[#allocation5 + $0x2a8] sm:$0xff] %v516
    %925 = vst [vmem:[#allocation5 + $0x2b0] sm:$0xff] %v517
    %926 = vst [vmem:[#allocation5 + $0x2b8] sm:$0xff] %v518
    %927 = vst [vmem:[#allocation5 + $0x2c0] sm:$0xff] %v519
    %928 = vst [vmem:[#allocation5 + $0x2c8] sm:$0xff] %v520
    %929 = vst [vmem:[#allocation5 + $0x2d0] sm:$0xff] %v521
    %930 = vst [vmem:[#allocation5 + $0x2d8] sm:$0xff] %v522
    %931 = vst [vmem:[#allocation5 + $0x2e0] sm:$0xff] %v523
    %932 = vst [vmem:[#allocation5 + $0x2e8] sm:$0xff] %v524
    %933 = vst [vmem:[#allocation5 + $0x2f0] sm:$0xff] %v525
    %934 = vst [vmem:[#allocation5 + $0x2f8] sm:$0xff] %v526
    %935 = vst [vmem:[#allocation5 + $0x300] sm:$0xff] %v527
    %936 = vst [vmem:[#allocation5 + $0x308] sm:$0xff] %v528
    %937 = vst [vmem:[#allocation5 + $0x310] sm:$0xff] %v529
    %938 = vst [vmem:[#allocation5 + $0x318] sm:$0xff] %v530
    %939 = vst [vmem:[#allocation5 + $0x320] sm:$0xff] %v531
    %940 = vst [vmem:[#allocation5 + $0x328] sm:$0xff] %v532
    %941 = vst [vmem:[#allocation5 + $0x330] sm:$0xff] %v533
    %942 = vst [vmem:[#allocation5 + $0x338] sm:$0xff] %v534
    %943 = vst [vmem:[#allocation5 + $0x340] sm:$0xff] %v535
    %944 = vst [vmem:[#allocation5 + $0x348] sm:$0xff] %v536
    %945 = vst [vmem:[#allocation5 + $0x350] sm:$0xff] %v537
    %946 = vst [vmem:[#allocation5 + $0x358] sm:$0xff] %v538
    %947 = vst [vmem:[#allocation5 + $0x360] sm:$0xff] %v539
    %948 = vst [vmem:[#allocation5 + $0x368] sm:$0xff] %v540
    %949 = vst [vmem:[#allocation5 + $0x370] sm:$0xff] %v541
    %950 = vst [vmem:[#allocation5 + $0x378] sm:$0xff] %v542
    %951 = vst [vmem:[#allocation5 + $0x380] sm:$0xff] %v543
    %952 = vst [vmem:[#allocation5 + $0x388] sm:$0xff] %v544
    %953 = vst [vmem:[#allocation5 + $0x390] sm:$0xff] %v545
    %954 = vst [vmem:[#allocation5 + $0x398] sm:$0xff] %v546
    %955 = vst [vmem:[#allocation5 + $0x3a0] sm:$0xff] %v547
    %956 = vst [vmem:[#allocation5 + $0x3a8] sm:$0xff] %v548
    %957 = vst [vmem:[#allocation5 + $0x3b0] sm:$0xff] %v549
    %958 = vst [vmem:[#allocation5 + $0x3b8] sm:$0xff] %v550
    %959 = vst [vmem:[#allocation5 + $0x3c0] sm:$0xff] %v551
    %960 = vst [vmem:[#allocation5 + $0x3c8] sm:$0xff] %v552
    %961 = vst [vmem:[#allocation5 + $0x3d0] sm:$0xff] %v553
    %962 = vst [vmem:[#allocation5 + $0x3d8] sm:$0xff] %v554
    %963 = vst [vmem:[#allocation5 + $0x3e0] sm:$0xff] %v555
    %964 = vst [vmem:[#allocation5 + $0x3e8] sm:$0xff] %v556
    %965 = vst [vmem:[#allocation5 + $0x3f0] sm:$0xff] %v557
    %966 = vst [vmem:[#allocation5 + $0x3f8] sm:$0xff] %v558
    %967 = vst [vmem:[#allocation5 + $0x400] sm:$0xff] %v559
    %968 = vst [vmem:[#allocation5 + $0x408] sm:$0xff] %v560
    %969 = vst [vmem:[#allocation5 + $0x410] sm:$0xff] %v561
    %970 = vst [vmem:[#allocation5 + $0x418] sm:$0xff] %v562
    %971 = vst [vmem:[#allocation5 + $0x420] sm:$0xff] %v563
    %972 = vst [vmem:[#allocation5 + $0x428] sm:$0xff] %v564
    %973 = vst [vmem:[#allocation5 + $0x430] sm:$0xff] %v565
    %974 = vst [vmem:[#allocation5 + $0x438] sm:$0xff] %v566
    %975 = vst [vmem:[#allocation5 + $0x440] sm:$0xff] %v567
    %976 = vst [vmem:[#allocation5 + $0x448] sm:$0xff] %v568
    %977 = vst [vmem:[#allocation5 + $0x450] sm:$0xff] %v569
    %978 = vst [vmem:[#allocation5 + $0x458] sm:$0xff] %v570
    %979 = vst [vmem:[#allocation5 + $0x460] sm:$0xff] %v571
    %980 = vst [vmem:[#allocation5 + $0x468] sm:$0xff] %v572
    %981 = vst [vmem:[#allocation5 + $0x470] sm:$0xff] %v573
    %982 = vst [vmem:[#allocation5 + $0x478] sm:$0xff] %v574
    %983 = vst [vmem:[#allocation5 + $0x480] sm:$0xff] %v575
    %984 = vst [vmem:[#allocation5 + $0x488] sm:$0xff] %v576
    %985 = vst [vmem:[#allocation5 + $0x490] sm:$0xff] %v577
    %986 = vst [vmem:[#allocation5 + $0x498] sm:$0xff] %v578
    %987 = vst [vmem:[#allocation5 + $0x4a0] sm:$0xff] %v579
    %988 = vst [vmem:[#allocation5 + $0x4a8] sm:$0xff] %v580
    %989 = vst [vmem:[#allocation5 + $0x4b0] sm:$0xff] %v581
    %990 = vst [vmem:[#allocation5 + $0x4b8] sm:$0xff] %v582
    %991 = vst [vmem:[#allocation5 + $0x4c0] sm:$0xff] %v583
    %992 = vst [vmem:[#allocation5 + $0x4c8] sm:$0xff] %v584
    %993 = vst [vmem:[#allocation5 + $0x4d0] sm:$0xff] %v585
    %994 = vst [vmem:[#allocation5 + $0x4d8] sm:$0xff] %v586
    %995 = vst [vmem:[#allocation5 + $0x4e0] sm:$0xff] %v587
    %996 = vst [vmem:[#allocation5 + $0x4e8] sm:$0xff] %v588
    %997 = vst [vmem:[#allocation5 + $0x4f0] sm:$0xff] %v589
    %998 = vst [vmem:[#allocation5 + $0x4f8] sm:$0xff] %v590
    %999 = vst [vmem:[#allocation5 + $0x500] sm:$0xff] %v591
    %1000 = vst [vmem:[#allocation5 + $0x508] sm:$0xff] %v592
    %1001 = vst [vmem:[#allocation5 + $0x510] sm:$0xff] %v593
    %1002 = vst [vmem:[#allocation5 + $0x518] sm:$0xff] %v594
    %1003 = vst [vmem:[#allocation5 + $0x520] sm:$0xff] %v595
    %1004 = vst [vmem:[#allocation5 + $0x528] sm:$0xff] %v596
    %1005 = vst [vmem:[#allocation5 + $0x530] sm:$0xff] %v597
    %1006 = vst [vmem:[#allocation5 + $0x538] sm:$0xff] %v598
    %1007 = vst [vmem:[#allocation5 + $0x540] sm:$0xff] %v599
    %1008 = vst [vmem:[#allocation5 + $0x548] sm:$0xff] %v600
    %1009 = vst [vmem:[#allocation5 + $0x550] sm:$0xff] %v601
    %1010 = vst [vmem:[#allocation5 + $0x558] sm:$0xff] %v602
    %1011 = vst [vmem:[#allocation5 + $0x560] sm:$0xff] %v603
    %1012 = vst [vmem:[#allocation5 + $0x568] sm:$0xff] %v604
    %1013 = vst [vmem:[#allocation5 + $0x570] sm:$0xff] %v605
    %1014 = vst [vmem:[#allocation5 + $0x578] sm:$0xff] %v606
    %1015 = vst [vmem:[#allocation5 + $0x580] sm:$0xff] %v607
    %1016 = vst [vmem:[#allocation5 + $0x588] sm:$0xff] %v608
    %1017 = vst [vmem:[#allocation5 + $0x590] sm:$0xff] %v609
    %1018 = vst [vmem:[#allocation5 + $0x598] sm:$0xff] %v610
    %1019 = vst [vmem:[#allocation5 + $0x5a0] sm:$0xff] %v611
    %1020 = vst [vmem:[#allocation5 + $0x5a8] sm:$0xff] %v612
    %1021 = vst [vmem:[#allocation5 + $0x5b0] sm:$0xff] %v613
    %1022 = vst [vmem:[#allocation5 + $0x5b8] sm:$0xff] %v614
    %1023 = vst [vmem:[#allocation5 + $0x5c0] sm:$0xff] %v615
    %1024 = vst [vmem:[#allocation5 + $0x5c8] sm:$0xff] %v616
    %1025 = vst [vmem:[#allocation5 + $0x5d0] sm:$0xff] %v617
    %1026 = vst [vmem:[#allocation5 + $0x5d8] sm:$0xff] %v618
    %1027 = vst [vmem:[#allocation5 + $0x5e0] sm:$0xff] %v619
    %1028 = vst [vmem:[#allocation5 + $0x5e8] sm:$0xff] %v620
    %1029 = vst [vmem:[#allocation5 + $0x5f0] sm:$0xff] %v621
    %1030 = vst [vmem:[#allocation5 + $0x5f8] sm:$0xff] %v622
    %1031 = vst [vmem:[#allocation5 + $0x600] sm:$0xff] %v623
    %1032 = vst [vmem:[#allocation5 + $0x608] sm:$0xff] %v624
    %1033 = vst [vmem:[#allocation5 + $0x610] sm:$0xff] %v625
    %1034 = vst [vmem:[#allocation5 + $0x618] sm:$0xff] %v626
    %1035 = vst [vmem:[#allocation5 + $0x620] sm:$0xff] %v627
    %1036 = vst [vmem:[#allocation5 + $0x628] sm:$0xff] %v628
    %1037 = vst [vmem:[#allocation5 + $0x630] sm:$0xff] %v629
    %1038 = vst [vmem:[#allocation5 + $0x638] sm:$0xff] %v630
    %1039 = vst [vmem:[#allocation5 + $0x640] sm:$0xff] %v631
    %1040 = vst [vmem:[#allocation5 + $0x648] sm:$0xff] %v632
    %1041 = vst [vmem:[#allocation5 + $0x650] sm:$0xff] %v633
    %1042 = vst [vmem:[#allocation5 + $0x658] sm:$0xff] %v634
    %1043 = vst [vmem:[#allocation5 + $0x660] sm:$0xff] %v635
    %1044 = vst [vmem:[#allocation5 + $0x668] sm:$0xff] %v636
    %1045 = vst [vmem:[#allocation5 + $0x670] sm:$0xff] %v637
    %1046 = vst [vmem:[#allocation5 + $0x678] sm:$0xff] %v638
    %1047 = vst [vmem:[#allocation5 + $0x680] sm:$0xff] %v639
    %1048 = vst [vmem:[#allocation5 + $0x688] sm:$0xff] %v640
    %1049 = vst [vmem:[#allocation5 + $0x690] sm:$0xff] %v641
    %1050 = vst [vmem:[#allocation5 + $0x698] sm:$0xff] %v642
    %1051 = vst [vmem:[#allocation5 + $0x6a0] sm:$0xff] %v643
    %1052 = vst [vmem:[#allocation5 + $0x6a8] sm:$0xff] %v644
    %1053 = vst [vmem:[#allocation5 + $0x6b0] sm:$0xff] %v645
    %1054 = vst [vmem:[#allocation5 + $0x6b8] sm:$0xff] %v646
    %1055 = vst [vmem:[#allocation5 + $0x6c0] sm:$0xff] %v647
    %1056 = vst [vmem:[#allocation5 + $0x6c8] sm:$0xff] %v648
    %1057 = vst [vmem:[#allocation5 + $0x6d0] sm:$0xff] %v649
    %1058 = vst [vmem:[#allocation5 + $0x6d8] sm:$0xff] %v650
    %1059 = vst [vmem:[#allocation5 + $0x6e0] sm:$0xff] %v651
    %1060 = vst [vmem:[#allocation5 + $0x6e8] sm:$0xff] %v652
    %1061 = vst [vmem:[#allocation5 + $0x6f0] sm:$0xff] %v653
    %1062 = vst [vmem:[#allocation5 + $0x6f8] sm:$0xff] %v654
    %1063 = vst [vmem:[#allocation5 + $0x700] sm:$0xff] %v655
    %1064 = vst [vmem:[#allocation5 + $0x708] sm:$0xff] %v656
    %1065 = vst [vmem:[#allocation5 + $0x710] sm:$0xff] %v657
    %1066 = vst [vmem:[#allocation5 + $0x718] sm:$0xff] %v658
    %1067 = vst [vmem:[#allocation5 + $0x720] sm:$0xff] %v659
    %1068 = vst [vmem:[#allocation5 + $0x728] sm:$0xff] %v660
    %1069 = vst [vmem:[#allocation5 + $0x730] sm:$0xff] %v661
    %1070 = vst [vmem:[#allocation5 + $0x738] sm:$0xff] %v662
    %1071 = vst [vmem:[#allocation5 + $0x740] sm:$0xff] %v663
    %1072 = vst [vmem:[#allocation5 + $0x748] sm:$0xff] %v664
    %1073 = vst [vmem:[#allocation5 + $0x750] sm:$0xff] %v665
    %1074 = vst [vmem:[#allocation5 + $0x758] sm:$0xff] %v666
    %1075 = vst [vmem:[#allocation5 + $0x760] sm:$0xff] %v667
    %1076 = vst [vmem:[#allocation5 + $0x768] sm:$0xff] %v668
    %1077 = vst [vmem:[#allocation5 + $0x770] sm:$0xff] %v669
    %1078 = vst [vmem:[#allocation5 + $0x778] sm:$0xff] %v670
    %1079 = vst [vmem:[#allocation5 + $0x780] sm:$0xff] %v671
    %1080 = vst [vmem:[#allocation5 + $0x788] sm:$0xff] %v672
    %1081 = vst [vmem:[#allocation5 + $0x790] sm:$0xff] %v673
    %1082 = vst [vmem:[#allocation5 + $0x798] sm:$0xff] %v674
    %1083 = vst [vmem:[#allocation5 + $0x7a0] sm:$0xff] %v675
    %1084 = vst [vmem:[#allocation5 + $0x7a8] sm:$0xff] %v676
    %1085 = vst [vmem:[#allocation5 + $0x7b0] sm:$0xff] %v677
    %1086 = vst [vmem:[#allocation5 + $0x7b8] sm:$0xff] %v678
    %1087 = vst [vmem:[#allocation5 + $0x7c0] sm:$0xff] %v679
    %1088 = vst [vmem:[#allocation5 + $0x7c8] sm:$0xff] %v680
    %1089 = vst [vmem:[#allocation5 + $0x7d0] sm:$0xff] %v681
    %1090 = vst [vmem:[#allocation5 + $0x7d8] sm:$0xff] %v682
    %1091 = vst [vmem:[#allocation5 + $0x7e0] sm:$0xff] %v683
    %1092 = vst [vmem:[#allocation5 + $0x7e8] sm:$0xff] %v684
    %1093 = vst [vmem:[#allocation5 + $0x7f0] sm:$0xff] %v685
    %1094 = vst [vmem:[#allocation5 + $0x7f8] sm:$0xff] %v686
    %1095 = vst [vmem:[#allocation5 + $0x800] sm:$0xff] %v687
    %1096 = vst [vmem:[#allocation5 + $0x808] sm:$0xff] %v688
    %1097 = vst [vmem:[#allocation5 + $0x810] sm:$0xff] %v689
    %1098 = vst [vmem:[#allocation5 + $0x818] sm:$0xff] %v690
    %1099 = vst [vmem:[#allocation5 + $0x820] sm:$0xff] %v691
    %1100 = vst [vmem:[#allocation5 + $0x828] sm:$0xff] %v692
    %1101 = vst [vmem:[#allocation5 + $0x830] sm:$0xff] %v693
    %1102 = vst [vmem:[#allocation5 + $0x838] sm:$0xff] %v694
    %1103 = vst [vmem:[#allocation5 + $0x840] sm:$0xff] %v695
    %1104 = vst [vmem:[#allocation5 + $0x848] sm:$0xff] %v696
    %1105 = vst [vmem:[#allocation5 + $0x850] sm:$0xff] %v697
    %1106 = vst [vmem:[#allocation5 + $0x858] sm:$0xff] %v698
    %1107 = vst [vmem:[#allocation5 + $0x860] sm:$0xff] %v699
    %1108 = vst [vmem:[#allocation5 + $0x868] sm:$0xff] %v700
    %1109 = vst [vmem:[#allocation5 + $0x870] sm:$0xff] %v701
    %1110 = vst [vmem:[#allocation5 + $0x878] sm:$0xff] %v702
    %1111 = vst [vmem:[#allocation5 + $0x880] sm:$0xff] %v703
    %1112 = vst [vmem:[#allocation5 + $0x888] sm:$0xff] %v704
    %1113 = vst [vmem:[#allocation5 + $0x890] sm:$0xff] %v705
    %1114 = vst [vmem:[#allocation5 + $0x898] sm:$0xff] %v706
    %1115 = vst [vmem:[#allocation5 + $0x8a0] sm:$0xff] %v707
    %1116 = vst [vmem:[#allocation5 + $0x8a8] sm:$0xff] %v708
    %1117 = vst [vmem:[#allocation5 + $0x8b0] sm:$0xff] %v709
    %1118 = vst [vmem:[#allocation5 + $0x8b8] sm:$0xff] %v710
    %1119 = vst [vmem:[#allocation5 + $0x8c0] sm:$0xff] %v711
    %1120 = vst [vmem:[#allocation5 + $0x8c8] sm:$0xff] %v712
    %1121 = vst [vmem:[#allocation5 + $0x8d0] sm:$0xff] %v713
    %1122 = vst [vmem:[#allocation5 + $0x8d8] sm:$0xff] %v714
    %1123 = vst [vmem:[#allocation5 + $0x8e0] sm:$0xff] %v715
    %1124 = vst [vmem:[#allocation5 + $0x8e8] sm:$0xff] %v716
    %1125 = vst [vmem:[#allocation5 + $0x8f0] sm:$0xff] %v717
    %1126 = vst [vmem:[#allocation5 + $0x8f8] sm:$0xff] %v718
    %1127 = vst [vmem:[#allocation5 + $0x900] sm:$0xff] %v719
    %1128 = vst [vmem:[#allocation5 + $0x908] sm:$0xff] %v720
    %1129 = vst [vmem:[#allocation5 + $0x910] sm:$0xff] %v721
    %1130 = vst [vmem:[#allocation5 + $0x918] sm:$0xff] %v722
    %1131 = vst [vmem:[#allocation5 + $0x920] sm:$0xff] %v723
    %1132 = vst [vmem:[#allocation5 + $0x928] sm:$0xff] %v724
    %1133 = vst [vmem:[#allocation5 + $0x930] sm:$0xff] %v725
    %1134 = vst [vmem:[#allocation5 + $0x938] sm:$0xff] %v726
    %1135 = vst [vmem:[#allocation5 + $0x940] sm:$0xff] %v727
    %1136 = vst [vmem:[#allocation5 + $0x948] sm:$0xff] %v728
    %1137 = vst [vmem:[#allocation5 + $0x950] sm:$0xff] %v729
    %1138 = vst [vmem:[#allocation5 + $0x958] sm:$0xff] %v730
    %1139 = vst [vmem:[#allocation5 + $0x960] sm:$0xff] %v731
    %1140 = vst [vmem:[#allocation5 + $0x968] sm:$0xff] %v732
    %1141 = vst [vmem:[#allocation5 + $0x970] sm:$0xff] %v733
    %1142 = vst [vmem:[#allocation5 + $0x978] sm:$0xff] %v734
    %1143 = vst [vmem:[#allocation5 + $0x980] sm:$0xff] %v735
    %1144 = vst [vmem:[#allocation5 + $0x988] sm:$0xff] %v736
    %1145 = vst [vmem:[#allocation5 + $0x990] sm:$0xff] %v737
    %1146 = vst [vmem:[#allocation5 + $0x998] sm:$0xff] %v738
    %1147 = vst [vmem:[#allocation5 + $0x9a0] sm:$0xff] %v739
    %1148 = vst [vmem:[#allocation5 + $0x9a8] sm:$0xff] %v740
    %1149 = vst [vmem:[#allocation5 + $0x9b0] sm:$0xff] %v741
    %1150 = vst [vmem:[#allocation5 + $0x9b8] sm:$0xff] %v742
    %1151 = vst [vmem:[#allocation5 + $0x9c0] sm:$0xff] %v743
    %1152 = vst [vmem:[#allocation5 + $0x9c8] sm:$0xff] %v744
    %1153 = vst [vmem:[#allocation5 + $0x9d0] sm:$0xff] %v745
    %1154 = vst [vmem:[#allocation5 + $0x9d8] sm:$0xff] %v746
    %1155 = vst [vmem:[#allocation5 + $0x9e0] sm:$0xff] %v747
    %1156 = vst [vmem:[#allocation5 + $0x9e8] sm:$0xff] %v748
    %1157 = vst [vmem:[#allocation5 + $0x9f0] sm:$0xff] %v749
    %1158 = vst [vmem:[#allocation5 + $0x9f8] sm:$0xff] %v750
    %1159 = vst [vmem:[#allocation5 + $0xa00] sm:$0xff] %v751
    %1160 = vst [vmem:[#allocation5 + $0xa08] sm:$0xff] %v752
    %1161 = vst [vmem:[#allocation5 + $0xa10] sm:$0xff] %v753
    %1162 = vst [vmem:[#allocation5 + $0xa18] sm:$0xff] %v754
    %1163 = vst [vmem:[#allocation5 + $0xa20] sm:$0xff] %v755
    %1164 = vst [vmem:[#allocation5 + $0xa28] sm:$0xff] %v756
    %1165 = vst [vmem:[#allocation5 + $0xa30] sm:$0xff] %v757
    %1166 = vst [vmem:[#allocation5 + $0xa38] sm:$0xff] %v758
    %1167 = vst [vmem:[#allocation5 + $0xa40] sm:$0xff] %v759
    %1168 = vst [vmem:[#allocation5 + $0xa48] sm:$0xff] %v760
    %1169 = vst [vmem:[#allocation5 + $0xa50] sm:$0xff] %v761
    %1170 = vst [vmem:[#allocation5 + $0xa58] sm:$0xff] %v762
    %1171 = vst [vmem:[#allocation5 + $0xa60] sm:$0xff] %v763
    %1172 = vst [vmem:[#allocation5 + $0xa68] sm:$0xff] %v764
    %1173 = vst [vmem:[#allocation5 + $0xa70] sm:$0xff] %v765
    %1174 = vst [vmem:[#allocation5 + $0xa78] sm:$0xff] %v766
    %1175 = vst [vmem:[#allocation5 + $0xa80] sm:$0xff] %v767
    %1176 = vst [vmem:[#allocation5 + $0xa88] sm:$0xff] %v768
    %1177 = vst [vmem:[#allocation5 + $0xa90] sm:$0xff] %v769
    %1178 = vst [vmem:[#allocation5 + $0xa98] sm:$0xff] %v770
    %1179 = vst [vmem:[#allocation5 + $0xaa0] sm:$0xff] %v771
    %1180 = vst [vmem:[#allocation5 + $0xaa8] sm:$0xff] %v772
    %1181 = vst [vmem:[#allocation5 + $0xab0] sm:$0xff] %v773
    %1182 = vst [vmem:[#allocation5 + $0xab8] sm:$0xff] %v774
    %1183 = vst [vmem:[#allocation5 + $0xac0] sm:$0xff] %v775
    %1184 = vst [vmem:[#allocation5 + $0xac8] sm:$0xff] %v776
    %1185 = vst [vmem:[#allocation5 + $0xad0] sm:$0xff] %v777
    %1186 = vst [vmem:[#allocation5 + $0xad8] sm:$0xff] %v778
    %1187 = vst [vmem:[#allocation5 + $0xae0] sm:$0xff] %v779
    %1188 = vst [vmem:[#allocation5 + $0xae8] sm:$0xff] %v780
    %1189 = vst [vmem:[#allocation5 + $0xaf0] sm:$0xff] %v781
    %1190 = vst [vmem:[#allocation5 + $0xaf8] sm:$0xff] %v782
    %1191 = vst [vmem:[#allocation5 + $0xb00] sm:$0xff] %v783
    %1192 = vst [vmem:[#allocation5 + $0xb08] sm:$0xff] %v784
    %1193 = vst [vmem:[#allocation5 + $0xb10] sm:$0xff] %v785
    %1194 = vst [vmem:[#allocation5 + $0xb18] sm:$0xff] %v786
    %1195 = vst [vmem:[#allocation5 + $0xb20] sm:$0xff] %v787
    %1196 = vst [vmem:[#allocation5 + $0xb28] sm:$0xff] %v788
    %1197 = vst [vmem:[#allocation5 + $0xb30] sm:$0xff] %v789
    %1198 = vst [vmem:[#allocation5 + $0xb38] sm:$0xff] %v790
    %1199 = vst [vmem:[#allocation5 + $0xb40] sm:$0xff] %v791
    %1200 = vst [vmem:[#allocation5 + $0xb48] sm:$0xff] %v792
    %1201 = vst [vmem:[#allocation5 + $0xb50] sm:$0xff] %v793
    %1202 = vst [vmem:[#allocation5 + $0xb58] sm:$0xff] %v794
    %1203 = vst [vmem:[#allocation5 + $0xb60] sm:$0xff] %v795
    %1204 = vst [vmem:[#allocation5 + $0xb68] sm:$0xff] %v796
    %1205 = vst [vmem:[#allocation5 + $0xb70] sm:$0xff] %v797
    %1206 = vst [vmem:[#allocation5 + $0xb78] sm:$0xff] %v798
    %1207 = vst [vmem:[#allocation5 + $0xb80] sm:$0xff] %v799
    %1208 = vst [vmem:[#allocation5 + $0xb88] sm:$0xff] %v800
    %1209 = vst [vmem:[#allocation5 + $0xb90] sm:$0xff] %v801
    %1210 = vst [vmem:[#allocation5 + $0xb98] sm:$0xff] %v802
    %1211 = vst [vmem:[#allocation5 + $0xba0] sm:$0xff] %v803
    %1212 = vst [vmem:[#allocation5 + $0xba8] sm:$0xff] %v804
    %1213 = vst [vmem:[#allocation5 + $0xbb0] sm:$0xff] %v805
    %1214 = vst [vmem:[#allocation5 + $0xbb8] sm:$0xff] %v806
    %1215 = vst [vmem:[#allocation5 + $0xbc0] sm:$0xff] %v807
    %1216 = vst [vmem:[#allocation5 + $0xbc8] sm:$0xff] %v808
    %1217 = vst [vmem:[#allocation5 + $0xbd0] sm:$0xff] %v809
    %1218 = vst [vmem:[#allocation5 + $0xbd8] sm:$0xff] %v810
    %1219 = vst [vmem:[#allocation5 + $0xbe0] sm:$0xff] %v811
    %1220 = vst [vmem:[#allocation5 + $0xbe8] sm:$0xff] %v812
    %1221 = vst [vmem:[#allocation5 + $0xbf0] sm:$0xff] %v813
    %1222 = vst [vmem:[#allocation5 + $0xbf8] sm:$0xff] %v814
    %1223 = vst [vmem:[#allocation5 + $0xc00] sm:$0xff] %v815
    %1224 = vst [vmem:[#allocation5 + $0xc08] sm:$0xff] %v816
    %1225 = vst [vmem:[#allocation5 + $0xc10] sm:$0xff] %v817
    %1226 = vst [vmem:[#allocation5 + $0xc18] sm:$0xff] %v818
    %1227 = vst [vmem:[#allocation5 + $0xc20] sm:$0xff] %v819
    %1228 = vst [vmem:[#allocation5 + $0xc28] sm:$0xff] %v820
    %1229 = vst [vmem:[#allocation5 + $0xc30] sm:$0xff] %v821
    %1230 = vst [vmem:[#allocation5 + $0xc38] sm:$0xff] %v822
    %1231 = vst [vmem:[#allocation5 + $0xc40] sm:$0xff] %v823
    %1232 = vst [vmem:[#allocation5 + $0xc48] sm:$0xff] %v824
    %1233 = vst [vmem:[#allocation5 + $0xc50] sm:$0xff] %v825
    %1234 = vst [vmem:[#allocation5 + $0xc58] sm:$0xff] %v826
    %1235 = vst [vmem:[#allocation5 + $0xc60] sm:$0xff] %v827
    %1236 = vst [vmem:[#allocation5 + $0xc68] sm:$0xff] %v828
    %1237 = vst [vmem:[#allocation5 + $0xc70] sm:$0xff] %v829
    %1238 = vst [vmem:[#allocation5 + $0xc78] sm:$0xff] %v830
    %1239 = vst [vmem:[#allocation5 + $0xc80] sm:$0xff] %v831
    %1240 = vst [vmem:[#allocation5 + $0xc88] sm:$0xff] %v832
    %1241 = vst [vmem:[#allocation5 + $0xc90] sm:$0xff] %v833
    %1242 = vst [vmem:[#allocation5 + $0xc98] sm:$0xff] %v834
    %1243 = vst [vmem:[#allocation5 + $0xca0] sm:$0xff] %v835
    %1244 = vst [vmem:[#allocation5 + $0xca8] sm:$0xff] %v836
    %1245 = vst [vmem:[#allocation5 + $0xcb0] sm:$0xff] %v837
    %1246 = vst [vmem:[#allocation5 + $0xcb8] sm:$0xff] %v838
    // Predicated region
    $region10: #{tpu_custom_call.1} parent=1 // pred_check
      _
    $region11: #{tpu_custom_call.1} parent=1 // pred_check_branch
      %1248 = sbr.rel (0) target = $region13
    $region12: #{tpu_custom_call.1} parent=1 // pred_region
      %s1250 = ssub.s32 52224, 52224
      %1251 = vsyncadd [#allocation4], %s1250
      %s1252 = sshll.u32 [#allocation5], 4
      %s1253 = int_to_ptr.vmem [resolvable:$true] %s1252
      %1258 = dma.vmem_to_hbm [thread:$0]  %s1253, 52224, %s1, [#allocation4], 512, 512, 32
    $region13: #{tpu_custom_call.1} parent=1 // pred_fallthru
      _
    // Predicated region
    $region14: #{tpu_custom_call.1} parent=1 // pred_check
      _
    $region15: #{tpu_custom_call.1} parent=1 // pred_check_branch
      %1260 = sbr.rel (0) target = $region17
    $region16: #{tpu_custom_call.1} parent=1 // pred_region
      %1261 = dma.done [#allocation4], 52224
    $region17: #{tpu_custom_call.1} parent=1 // pred_fallthru
      _
    %1262 = vsyncpa [#allocation3], 1
    %1263 = vsyncpa [#allocation4], 1

</llo_original>
